<compile_context>
chip_gen: v6e
topology: v6e:2x2x1
jax: 0.10.0
libtpu: 0.0.40
codegen_flags: <defaults>
</compile_context>

<pallas_src>
import jax
import jax.numpy as jnp
from jax.experimental import pallas as pl
from jax.experimental.pallas import tpu as pltpu


def _round_up(a, b):
    return -(-a // b) * b


def _cdiv(a, b):
    return -(-a // b)


# ---------------------------------------------------------------------------
# Kernel 1: 1x1 conv as an MXU contraction + per-tile partial BN statistics.
# ---------------------------------------------------------------------------
def _conv_stats_kernel(wx_ref, wg_ref, x_ref, g_ref, y_ref, psum_ref, psq_ref):
    x = x_ref[...]                      # (C_in, t_hw) f32, pixels on lanes
    g = g_ref[...]                      # (C_g,  t_hw) f32

    # conv: y = Wx @ x + Wg @ g  (tiny contraction -> MXU, VPU stays idle).
    y = (jnp.dot(wx_ref[...], x, preferred_element_type=jnp.float32,
                 precision=jax.lax.Precision.HIGHEST)
         + jnp.dot(wg_ref[...], g, preferred_element_type=jnp.float32,
                   precision=jax.lax.Precision.HIGHEST))

    y_ref[...] = y                      # (C_out, t_hw)

    # Per-tile partial statistics (lane-axis reductions -> XLU).
    psum_ref[...] = jnp.sum(y, axis=1, keepdims=True)       # (C_out, 1)
    psq_ref[...] = jnp.sum(y * y, axis=1, keepdims=True)    # (C_out, 1)


# ---------------------------------------------------------------------------
# Kernel 2: fused BatchNorm affine (precomputed per-channel scale/shift) + ReLU.
# ---------------------------------------------------------------------------
def _bn_relu_kernel(y_ref, scale_ref, shift_ref, o_ref):
    o_ref[...] = jnp.maximum(y_ref[...] * scale_ref[...] + shift_ref[...], 0.0)


def feature_guided_fusion(x, guided, conv_w, gamma, beta, *, eps=1e-5,
                          t_hw_max=65536):
    """x: (N, C_in, H, W), guided: (N, C_g, H, W) -> (N, C_in, H, W)."""
    N, C_in, H, W = x.shape
    _, C_g, _, _ = guided.shape
    C_out = C_in
    HW = H * W
    M = N * HW                           # true element count per channel

    # --- free layout: NCHW -> (N, C, H*W); no HBM transpose round trips. ---
    x3 = x.reshape(N, C_in, HW).astype(jnp.float32)
    g3 = guided.reshape(N, C_g, HW).astype(jnp.float32)

    # --- chip-aware tile sizing on the pixel (lane) axis --------------------
    try:
        vmem_phys = int(pltpu.get_tpu_info().vmem_capacity_bytes)
    except Exception:                    # fallback: v7x's 64 MiB physical
        vmem_phys = 64 << 20
    vmem_limit = min(vmem_phys // 2, 64 << 20)   # explicit scoped-VMEM limit
    budget = vmem_limit // 4                     # buffer budget for kernel 1
    bytes_per_col = 4 * (C_in + C_g + 2 * C_out)
    t_cap = max(128, (budget // (2 * bytes_per_col)) // 128 * 128)

    HW_pad = _round_up(HW, 128)
    t_hw = max(128, min(t_hw_max, t_cap, HW_pad) // 128 * 128)
    if N == 1 and HW_pad >= 256:
        # keep >= 2 grid steps so the "parallel" axes shard across v7x's 2 TCs
        t_hw = min(t_hw, _round_up(_cdiv(HW_pad, 2), 128))
    n_t = _cdiv(HW_pad, t_hw)
    t_hw = _round_up(_cdiv(HW_pad, n_t), 128)    # rebalance tiles evenly
    HW_alloc = n_t * t_hw

    if HW_alloc != HW:
        # Zero padding is stats-safe: the conv has no bias, so padded columns
        # contribute exactly 0 to both the sum and sum-of-squares partials.
        x3 = jnp.pad(x3, ((0, 0), (0, 0), (0, HW_alloc - HW)))
        g3 = jnp.pad(g3, ((0, 0), (0, 0), (0, HW_alloc - HW)))

    # Split the 1x1-conv weight; the channel concat then never materializes.
    w = conv_w.reshape(C_out, C_in + C_g).astype(jnp.float32)
    wx = w[:, :C_in]          # (C_out, C_in)
    wg = w[:, C_in:]          # (C_out, C_g)

    grid = (N, n_t)
    cparams = pltpu.CompilerParams(
        dimension_semantics=("parallel", "parallel"),
        vmem_limit_bytes=vmem_limit)

    conv_out, psum, psq = pl.pallas_call(
        _conv_stats_kernel,
        out_shape=(
            jax.ShapeDtypeStruct((N, C_out, HW_alloc), jnp.float32),
            jax.ShapeDtypeStruct((N, n_t, C_out, 1), jnp.float32),
            jax.ShapeDtypeStruct((N, n_t, C_out, 1), jnp.float32),
        ),
        grid_spec=pltpu.PrefetchScalarGridSpec(
            num_scalar_prefetch=0,
            grid=grid,
            in_specs=[
                pl.BlockSpec((C_out, C_in), lambda n, t: (0, 0)),   # wx (VMEM)
                pl.BlockSpec((C_out, C_g), lambda n, t: (0, 0)),    # wg (VMEM)
                pl.BlockSpec((pl.Squeezed(), C_in, t_hw), lambda n, t: (n, 0, t)),
                pl.BlockSpec((pl.Squeezed(), C_g, t_hw), lambda n, t: (n, 0, t)),
            ],
            out_specs=[
                pl.BlockSpec((pl.Squeezed(), C_out, t_hw), lambda n, t: (n, 0, t)),
                pl.BlockSpec((pl.Squeezed(), pl.Squeezed(), C_out, 1),
                             lambda n, t: (n, t, 0, 0)),
                pl.BlockSpec((pl.Squeezed(), pl.Squeezed(), C_out, 1),
                             lambda n, t: (n, t, 0, 0)),
            ],
        ),
        compiler_params=cparams,
    )(wx, wg, x3, g3)

    # --- tiny per-channel scalar math (C_out values) stays in plain JAX glue.
    # Training-mode BatchNorm2d: batch mean + biased variance over (N, H, W).
    # TODO(synk): E[y^2]-E[y]^2 in f32 can cancel for very large M; switch the
    # per-tile partials to a Welford-style combine if M grows past ~1e6.
    mean = psum.sum(axis=(0, 1))[:, 0] / M       # divide by true M, not padded
    ex2 = psq.sum(axis=(0, 1))[:, 0] / M
    var = ex2 - mean * mean
    scale = gamma.astype(jnp.float32) * jax.lax.rsqrt(var + eps)
    shift = beta.astype(jnp.float32) - mean * scale

    out3 = pl.pallas_call(
        _bn_relu_kernel,
        out_shape=jax.ShapeDtypeStruct((N, C_out, HW_alloc), jnp.float32),
        grid_spec=pltpu.PrefetchScalarGridSpec(
            num_scalar_prefetch=0,
            grid=grid,
            in_specs=[
                pl.BlockSpec((pl.Squeezed(), C_out, t_hw), lambda n, t: (n, 0, t)),
                pl.BlockSpec((C_out, 1), lambda n, t: (0, 0)),
                pl.BlockSpec((C_out, 1), lambda n, t: (0, 0)),
            ],
            out_specs=pl.BlockSpec((pl.Squeezed(), C_out, t_hw),
                                   lambda n, t: (n, 0, t)),
        ),
        compiler_params=cparams,
        input_output_aliases={0: 0},     # reuse conv_out's HBM buffer
    )(conv_out, scale.reshape(C_out, 1), shift.reshape(C_out, 1))

    # --- free layout back: (N, C, H*W) -> NCHW (slice only if we padded). ---
    if HW_alloc != HW:
        out3 = out3[:, :, :HW]
    return out3.reshape(N, C_out, H, W)


if __name__ == "__main__":
    # Small shapes consistent with the module: in_channels=4, guided_channels=4.
    N, C_in, C_g, H, W = 2, 4, 4, 16, 16

    key = jax.random.PRNGKey(0)
    kx, kg, kw, kgam, kbet = jax.random.split(key, 5)

    x = jax.random.normal(kx, (N, C_in, H, W), dtype=jnp.float32)
    guided = jax.random.normal(kg, (N, C_g, H, W), dtype=jnp.float32)

    # Deterministic parameter init (synthetic; no checkpoint load).
    conv_w = jax.random.normal(kw, (C_in, C_in + C_g, 1, 1), dtype=jnp.float32) * 0.1
    gamma = 1.0 + 0.1 * jax.random.normal(kgam, (C_in,), dtype=jnp.float32)
    beta = 0.1 * jax.random.normal(kbet, (C_in,), dtype=jnp.float32)

    out = feature_guided_fusion(x, guided, conv_w, gamma, beta)
    out = jax.block_until_ready(out)

    # Cheap sanity check against a pure-JAX reference of the same math.
    xcat_ref = jnp.concatenate([x, guided], axis=1)
    conv_ref = jnp.einsum("nchw,oc->nohw", xcat_ref,
                          conv_w.reshape(C_in, C_in + C_g),
                          precision=jax.lax.Precision.HIGHEST)
    mu = conv_ref.mean(axis=(0, 2, 3), keepdims=True)
    vr = conv_ref.var(axis=(0, 2, 3), keepdims=True)
    ref = jnp.maximum(
        (conv_ref - mu) / jnp.sqrt(vr + 1e-5) * gamma.reshape(1, -1, 1, 1)
        + beta.reshape(1, -1, 1, 1),
        0.0,
    )
    assert jnp.allclose(out, ref, atol=1e-4, rtol=1e-4), "mismatch vs reference"

    print("KERNEL_OK")
</pallas_src>

<mosaic_0001>
module attributes {stable_mosaic.version = 11 : i64} {
  func.func @_conv_stats_kernel(%arg0: i32, %arg1: i32, %arg2: memref<4x4xf32, #tpu.memory_space<vmem>>, %arg3: memref<4x4xf32, #tpu.memory_space<vmem>>, %arg4: memref<1x4x256xf32, #tpu.memory_space<vmem>>, %arg5: memref<1x4x256xf32, #tpu.memory_space<vmem>>, %arg6: memref<1x4x256xf32, #tpu.memory_space<vmem>>, %arg7: memref<1x1x4x1xf32, #tpu.memory_space<vmem>>, %arg8: memref<1x1x4x1xf32, #tpu.memory_space<vmem>>) attributes {dimension_semantics = [#tpu.dimension_semantics<parallel>, #tpu.dimension_semantics<parallel>], iteration_bounds = array<i64: 2, 1>, scalar_prefetch = 0 : i64, scratch_operands = 0 : i64, tpu.core_type = #tpu.core_type<tc>, window_params = [{pipeline_mode = #tpu.pipeline_mode<synchronous>, transform_indices = @transform_0, window_bounds = array<i64: 4, 4>}, {pipeline_mode = #tpu.pipeline_mode<synchronous>, transform_indices = @transform_1, window_bounds = array<i64: 4, 4>}, {transform_indices = @transform_2, window_bounds = array<i64: 1, 4, 256>}, {transform_indices = @transform_3, window_bounds = array<i64: 1, 4, 256>}, {transform_indices = @transform_4, window_bounds = array<i64: 1, 4, 256>}, {transform_indices = @transform_5, window_bounds = array<i64: 1, 1, 4, 1>}, {transform_indices = @transform_6, window_bounds = array<i64: 1, 1, 4, 1>}]} {
    %c0 = arith.constant 0 : index
    %c0_0 = arith.constant 0 : index
    %c0_1 = arith.constant 0 : index
    %0 = vector.load %arg4[%c0, %c0_0, %c0_1] : memref<1x4x256xf32, #tpu.memory_space<vmem>>, vector<1x4x256xf32>
    %1 = vector.shape_cast %0 : vector<1x4x256xf32> to vector<4x256xf32>
    %c0_2 = arith.constant 0 : index
    %c0_3 = arith.constant 0 : index
    %c0_4 = arith.constant 0 : index
    %2 = vector.load %arg5[%c0_2, %c0_3, %c0_4] : memref<1x4x256xf32, #tpu.memory_space<vmem>>, vector<1x4x256xf32>
    %3 = vector.shape_cast %2 : vector<1x4x256xf32> to vector<4x256xf32>
    %c0_5 = arith.constant 0 : index
    %c0_6 = arith.constant 0 : index
    %4 = vector.load %arg2[%c0_5, %c0_6] : memref<4x4xf32, #tpu.memory_space<vmem>>, vector<4x4xf32>
    %cst = arith.constant dense<0.000000e+00> : vector<4x256xf32>
    %5 = tpu.matmul %4, %1, %cst {dimension_numbers = #tpu.dot_dimension_numbers<[1], [0], [0], [1], [0, 0, 1, 1], [], []>, precision = #tpu.contract_precision<fp32>} : vector<4x4xf32>, vector<4x256xf32>, vector<4x256xf32> -> vector<4x256xf32>
    %c0_7 = arith.constant 0 : index
    %c0_8 = arith.constant 0 : index
    %6 = vector.load %arg3[%c0_7, %c0_8] : memref<4x4xf32, #tpu.memory_space<vmem>>, vector<4x4xf32>
    %cst_9 = arith.constant dense<0.000000e+00> : vector<4x256xf32>
    %7 = tpu.matmul %6, %3, %cst_9 {dimension_numbers = #tpu.dot_dimension_numbers<[1], [0], [0], [1], [0, 0, 1, 1], [], []>, precision = #tpu.contract_precision<fp32>} : vector<4x4xf32>, vector<4x256xf32>, vector<4x256xf32> -> vector<4x256xf32>
    %8 = arith.addf %5, %7 : vector<4x256xf32>
    %c0_10 = arith.constant 0 : index
    %c0_11 = arith.constant 0 : index
    %c0_12 = arith.constant 0 : index
    %9 = vector.load %arg6[%c0_10, %c0_11, %c0_12] : memref<1x4x256xf32, #tpu.memory_space<vmem>>, vector<1x4x256xf32>
    %10 = vector.shape_cast %9 : vector<1x4x256xf32> to vector<4x256xf32>
    %11 = vector.shape_cast %8 : vector<4x256xf32> to vector<1x4x256xf32>
    tpu.vector_store %arg6[%c0_10, %c0_11, %c0_12], %11 {strides = array<i32>} : memref<1x4x256xf32, #tpu.memory_space<vmem>>, vector<1x4x256xf32>,
    %cst_13 = arith.constant dense<0.000000e+00> : vector<4xf32>
    %12 = vector.multi_reduction <add>, %8, %cst_13 [1] : vector<4x256xf32> to vector<4xf32>
    %13 = vector.shape_cast %12 : vector<4xf32> to vector<4x1xf32>
    %c0_14 = arith.constant 0 : index
    %c0_15 = arith.constant 0 : index
    %c0_16 = arith.constant 0 : index
    %c0_17 = arith.constant 0 : index
    %14 = vector.load %arg7[%c0_14, %c0_15, %c0_16, %c0_17] : memref<1x1x4x1xf32, #tpu.memory_space<vmem>>, vector<1x1x4x1xf32>
    %15 = vector.shape_cast %14 : vector<1x1x4x1xf32> to vector<4x1xf32>
    %16 = vector.shape_cast %13 : vector<4x1xf32> to vector<1x1x4x1xf32>
    tpu.vector_store %arg7[%c0_14, %c0_15, %c0_16, %c0_17], %16 {strides = array<i32>} : memref<1x1x4x1xf32, #tpu.memory_space<vmem>>, vector<1x1x4x1xf32>,
    %17 = arith.mulf %8, %8 : vector<4x256xf32>
    %cst_18 = arith.constant dense<0.000000e+00> : vector<4xf32>
    %18 = vector.multi_reduction <add>, %17, %cst_18 [1] : vector<4x256xf32> to vector<4xf32>
    %19 = vector.shape_cast %18 : vector<4xf32> to vector<4x1xf32>
    %c0_19 = arith.constant 0 : index
    %c0_20 = arith.constant 0 : index
    %c0_21 = arith.constant 0 : index
    %c0_22 = arith.constant 0 : index
    %20 = vector.load %arg8[%c0_19, %c0_20, %c0_21, %c0_22] : memref<1x1x4x1xf32, #tpu.memory_space<vmem>>, vector<1x1x4x1xf32>
    %21 = vector.shape_cast %20 : vector<1x1x4x1xf32> to vector<4x1xf32>
    %22 = vector.shape_cast %19 : vector<4x1xf32> to vector<1x1x4x1xf32>
    tpu.vector_store %arg8[%c0_19, %c0_20, %c0_21, %c0_22], %22 {strides = array<i32>} : memref<1x1x4x1xf32, #tpu.memory_space<vmem>>, vector<1x1x4x1xf32>,
    return
  }
  func.func @transform_0(%arg0: i32, %arg1: i32) -> (i32, i32) {
    %c0_i32 = arith.constant 0 : i32
    %c0_i32_0 = arith.constant 0 : i32
    %c0_i32_1 = arith.constant 0 : i32
    return %c0_i32, %c0_i32_0 : i32, i32
  }
  func.func @transform_1(%arg0: i32, %arg1: i32) -> (i32, i32) {
    %c0_i32 = arith.constant 0 : i32
    %c0_i32_0 = arith.constant 0 : i32
    %c0_i32_1 = arith.constant 0 : i32
    return %c0_i32, %c0_i32_0 : i32, i32
  }
  func.func @transform_2(%arg0: i32, %arg1: i32) -> (i32, i32, i32) {
    %c0_i32 = arith.constant 0 : i32
    %c0_i32_0 = arith.constant 0 : i32
    return %arg0, %c0_i32, %arg1 : i32, i32, i32
  }
  func.func @transform_3(%arg0: i32, %arg1: i32) -> (i32, i32, i32) {
    %c0_i32 = arith.constant 0 : i32
    %c0_i32_0 = arith.constant 0 : i32
    return %arg0, %c0_i32, %arg1 : i32, i32, i32
  }
  func.func @transform_4(%arg0: i32, %arg1: i32) -> (i32, i32, i32) {
    %c0_i32 = arith.constant 0 : i32
    %c0_i32_0 = arith.constant 0 : i32
    return %arg0, %c0_i32, %arg1 : i32, i32, i32
  }
  func.func @transform_5(%arg0: i32, %arg1: i32) -> (i32, i32, i32, i32) {
    %c0_i32 = arith.constant 0 : i32
    %c0_i32_0 = arith.constant 0 : i32
    %c0_i32_1 = arith.constant 0 : i32
    return %arg0, %arg1, %c0_i32, %c0_i32_0 : i32, i32, i32, i32
  }
  func.func @transform_6(%arg0: i32, %arg1: i32) -> (i32, i32, i32, i32) {
    %c0_i32 = arith.constant 0 : i32
    %c0_i32_0 = arith.constant 0 : i32
    %c0_i32_1 = arith.constant 0 : i32
    return %arg0, %arg1, %c0_i32, %c0_i32_0 : i32, i32, i32, i32
  }
}

</mosaic_0001>

<llo_original>
// kernel: tpu_custom_call.1
$region0: #{tpu_custom_call.1}
  #allocation0 [shape = 'u32[]', space=smem, size = 0x4, offset = 0x4, fixed_abs, tag = 'smem constant byte address 0x4 - core index']
  #allocation1 [shape = 'u32[144,128]{1,0:T(1,128)}', space=vmem, size = 0x12000, scoped, tag = 'internal scratch']
  %s0 = inlined_call_operand.hbm [shape: f32[4,4], index: 0, kind: input, shape index: {}]
  %s1 = inlined_call_operand.hbm [shape: f32[4,4], index: 1, kind: input, shape index: {}]
  %s2 = inlined_call_operand.hbm [shape: f32[2,4,256], index: 2, kind: input, shape index: {}]
  %s3 = inlined_call_operand.hbm [shape: f32[2,4,256], index: 3, kind: input, shape index: {}]
  %s4 = inlined_call_operand.hbm [shape: f32[2,4,256], index: 4, kind: output, shape index: {0}]
  %s5 = inlined_call_operand.vmem [shape: f32[2,1,4,1], index: 5, kind: output, shape index: {1}]
  %s6 = inlined_call_operand.vmem [shape: f32[2,1,4,1], index: 6, kind: output, shape index: {2}]
  %7 = xla_tuple %s4, %s5, %s6
  %s8 = sld [smem:[#allocation0]]
  $region81: #{tpu_custom_call.1} parent=0
    _
  %s10 = ssub.s32 1, %s8
  %s11 = scalar_select 0, %s10, %s8
  $region1: #{tpu_custom_call.1} parent=0
    #allocation2 [shape = 'u8[2048]{0}', space=vmem, size = 0x800, scoped, tag = 'input window, operand 0, single buffered']
    #allocation3 [shape = 's32[2]{0}', space=sflag, size = 0x8, scoped, tag = 'scoped memory for tpu_custom_call.1']
    #allocation4 [shape = 's32[2]{0}', space=sflag, size = 0x8, scoped, tag = 'scoped memory for tpu_custom_call.1']
    #allocation5 [shape = 'u8[2048]{0}', space=vmem, size = 0x800, scoped, tag = 'input window, operand 1, single buffered']
    #allocation6 [shape = 's32[1]{0}', space=sflag, size = 0x4, scoped, tag = 'scoped memory for tpu_custom_call.1']
    #allocation7 [shape = 'u8[8192]{0}', space=vmem, size = 0x2000, scoped, tag = 'input window, operand 2']
    #allocation8 [shape = 'u8[8192]{0}', space=vmem, size = 0x2000, scoped, tag = 'input window, operand 3']
    #allocation9 [shape = 'u8[8192]{0}', space=vmem, size = 0x2000, scoped, tag = 'output window, operand 0']
    %12 = vsyncpa [#allocation3], 0
    %13 = vsyncpa [#allocation6], 0
    %14 = vsyncpa [#allocation4], 0
    %s15 = scalar_lea.sflag [#allocation4], 1
    %16 = vsyncpa %s15, 0
    loop: start=0, step=1, limit=4
    $region2: #{tpu_custom_call.1} parent=1 // loop_pre_header
      _
    $region3: #{tpu_custom_call.1} parent=1 // loop_header
      %s18 = sphi 0, %s22
      %p19 = scmp.ge.s32.totalorder %s18, 4
      %s25 = sphi 0, %s37
      %s26 = sphi 0, %s33
      %s27 = sphi 0, %s25
      %s28 = sphi 0, %s26
      %s29 = sphi 0, %s27
      %s30 = sphi 0, %s28
      %s38 = sphi 0, %s38
      %s40 = sphi 0, %s38
      %s41 = sphi 0, %s40
      %s55 = sphi 0, %s41
      %s59 = sphi 0, %s59
      %s61 = sphi 0, %s59
      %s62 = sphi 0, %s61
      %s76 = sphi 0, %s62
      %s84 = sphi 0, %s86
      %s87 = sphi 0, %s84
      %s88 = sphi 0, %s87
      %s104 = sphi 0, %s88
      %s112 = sphi 0, %s114
      %s115 = sphi 0, %s112
      %s116 = sphi 0, %s115
      %s132 = sphi 0, %s116
      %s140 = sphi 0, %s142
      %s143 = sphi 0, %s140
      %s144 = sphi 0, %s143
      %s160 = sphi 0, %s144
      %s168 = sphi 0, %s170
      %s171 = sphi 0, %s168
      %s172 = sphi 0, %s171
      %s188 = sphi 0, %s172
      %s196 = sphi 0, %s198
      %s199 = sphi 0, %s196
      %s200 = sphi 0, %s199
      %s216 = sphi 0, %s200
    $region4: #{tpu_custom_call.1} parent=1 // loop_header_branch
      %21 = sbr.rel (%p19) target = $region8
    $region5: #{tpu_custom_call.1} parent=1 // loop_body
      %s23 = ssub.s32 %s18, 1
      %s24 = ssub.s32 %s18, 2
      %s31 = sadd.s32 1, %s26
      %p32 = scmp.ge.s32.totalorder %s31, 1
      %s33 = scalar_select %p32, 0, %s31
      %s34 = sadd.s32 1, %s25
      %s35 = scalar_select %p32, %s34, %s25
      %p36 = scmp.ge.s32.totalorder %s35, 2
      %s37 = scalar_select %p36, 0, %s35
      %s39 = sadd.s32 %s38, 1
      %p42 = scmp.eq.s32.totalorder %s18, 1
      %p43 = scmp.ne.s32.totalorder %s38, %s40
      %p44 = scmp.eq.s32.totalorder %s18, 0
      %p45 = por %p43, %p44
      %p46 = scmp.ne.s32.totalorder %s38, %s40
      %p47 = scmp.eq.s32.totalorder %s23, 1
      %p48 = por %p46, %p47
      %p49 = scmp.ne.s32.totalorder %s40, %s41
      %p50 = scmp.eq.s32.totalorder %s23, 0
      %p51 = por %p49, %p50
      %p52 = scmp.ne.s32.totalorder %s40, %s41
      %p53 = scmp.eq.s32.totalorder %s24, 1
      %p54 = por %p52, %p53
      %p56 = scmp.ne.s32.totalorder %s41, %s55
      %p57 = scmp.eq.s32.totalorder %s24, 0
      %p58 = por %p56, %p57
      %s60 = sadd.s32 %s59, 1
      %p63 = scmp.eq.s32.totalorder %s18, 1
      %p64 = scmp.ne.s32.totalorder %s59, %s61
      %p65 = scmp.eq.s32.totalorder %s18, 0
      %p66 = por %p64, %p65
      %p67 = scmp.ne.s32.totalorder %s59, %s61
      %p68 = scmp.eq.s32.totalorder %s23, 1
      %p69 = por %p67, %p68
      %p70 = scmp.ne.s32.totalorder %s61, %s62
      %p71 = scmp.eq.s32.totalorder %s23, 0
      %p72 = por %p70, %p71
      %p73 = scmp.ne.s32.totalorder %s61, %s62
      %p74 = scmp.eq.s32.totalorder %s24, 1
      %p75 = por %p73, %p74
      %p77 = scmp.ne.s32.totalorder %s62, %s76
      %p78 = scmp.eq.s32.totalorder %s24, 0
      %p79 = por %p77, %p78
      %s80 = ssub.s32 %s25, %s37
      %s81 = ssub.s32 %s26, %s33
      %s82 = sor.u32 %s80, %s81
      %p83 = scmp.eq.s32.totalorder %s82, 0
      %s85 = sadd.s32 %s84, 1
      %s86 = scalar_select %p83, %s84, %s85
      %p89 = pneg %p83
      %p90 = scmp.eq.s32.totalorder %s18, 1
      %p91 = por %p89, %p90
      %p92 = scmp.ne.s32.totalorder %s84, %s87
      %p93 = scmp.eq.s32.totalorder %s18, 0
      %p94 = por %p92, %p93
      %p95 = scmp.ne.s32.totalorder %s84, %s87
      %p96 = scmp.eq.s32.totalorder %s23, 1
      %p97 = por %p95, %p96
      %p98 = scmp.ne.s32.totalorder %s87, %s88
      %p99 = scmp.eq.s32.totalorder %s23, 0
      %p100 = por %p98, %p99
      %p101 = scmp.ne.s32.totalorder %s87, %s88
      %p102 = scmp.eq.s32.totalorder %s24, 1
      %p103 = por %p101, %p102
      %p105 = scmp.ne.s32.totalorder %s88, %s104
      %p106 = scmp.eq.s32.totalorder %s24, 0
      %p107 = por %p105, %p106
      %s108 = ssub.s32 %s25, %s37
      %s109 = ssub.s32 %s26, %s33
      %s110 = sor.u32 %s108, %s109
      %p111 = scmp.eq.s32.totalorder %s110, 0
      %s113 = sadd.s32 %s112, 1
      %s114 = scalar_select %p111, %s112, %s113
      %p117 = pneg %p111
      %p118 = scmp.eq.s32.totalorder %s18, 1
      %p119 = por %p117, %p118
      %p120 = scmp.ne.s32.totalorder %s112, %s115
      %p121 = scmp.eq.s32.totalorder %s18, 0
      %p122 = por %p120, %p121
      %p123 = scmp.ne.s32.totalorder %s112, %s115
      %p124 = scmp.eq.s32.totalorder %s23, 1
      %p125 = por %p123, %p124
      %p126 = scmp.ne.s32.totalorder %s115, %s116
      %p127 = scmp.eq.s32.totalorder %s23, 0
      %p128 = por %p126, %p127
      %p129 = scmp.ne.s32.totalorder %s115, %s116
      %p130 = scmp.eq.s32.totalorder %s24, 1
      %p131 = por %p129, %p130
      %p133 = scmp.ne.s32.totalorder %s116, %s132
      %p134 = scmp.eq.s32.totalorder %s24, 0
      %p135 = por %p133, %p134
      %s136 = ssub.s32 %s25, %s37
      %s137 = ssub.s32 %s26, %s33
      %s138 = sor.u32 %s136, %s137
      %p139 = scmp.eq.s32.totalorder %s138, 0
      %s141 = sadd.s32 %s140, 1
      %s142 = scalar_select %p139, %s140, %s141
      %p145 = pneg %p139
      %p146 = scmp.eq.s32.totalorder %s18, 1
      %p147 = por %p145, %p146
      %p148 = scmp.ne.s32.totalorder %s140, %s143
      %p149 = scmp.eq.s32.totalorder %s18, 0
      %p150 = por %p148, %p149
      %p151 = scmp.ne.s32.totalorder %s140, %s143
      %p152 = scmp.eq.s32.totalorder %s23, 1
      %p153 = por %p151, %p152
      %p154 = scmp.ne.s32.totalorder %s143, %s144
      %p155 = scmp.eq.s32.totalorder %s23, 0
      %p156 = por %p154, %p155
      %p157 = scmp.ne.s32.totalorder %s143, %s144
      %p158 = scmp.eq.s32.totalorder %s24, 1
      %p159 = por %p157, %p158
      %p161 = scmp.ne.s32.totalorder %s144, %s160
      %p162 = scmp.eq.s32.totalorder %s24, 0
      %p163 = por %p161, %p162
      %s164 = ssub.s32 %s25, %s37
      %s165 = ssub.s32 %s26, %s33
      %s166 = sor.u32 %s164, %s165
      %p167 = scmp.eq.s32.totalorder %s166, 0
      %s169 = sadd.s32 %s168, 1
      %s170 = scalar_select %p167, %s168, %s169
      %p173 = pneg %p167
      %p174 = scmp.eq.s32.totalorder %s18, 1
      %p175 = por %p173, %p174
      %p176 = scmp.ne.s32.totalorder %s168, %s171
      %p177 = scmp.eq.s32.totalorder %s18, 0
      %p178 = por %p176, %p177
      %p179 = scmp.ne.s32.totalorder %s168, %s171
      %p180 = scmp.eq.s32.totalorder %s23, 1
      %p181 = por %p179, %p180
      %p182 = scmp.ne.s32.totalorder %s171, %s172
      %p183 = scmp.eq.s32.totalorder %s23, 0
      %p184 = por %p182, %p183
      %p185 = scmp.ne.s32.totalorder %s171, %s172
      %p186 = scmp.eq.s32.totalorder %s24, 1
      %p187 = por %p185, %p186
      %p189 = scmp.ne.s32.totalorder %s172, %s188
      %p190 = scmp.eq.s32.totalorder %s24, 0
      %p191 = por %p189, %p190
      %s192 = ssub.s32 %s25, %s37
      %s193 = ssub.s32 %s26, %s33
      %s194 = sor.u32 %s192, %s193
      %p195 = scmp.eq.s32.totalorder %s194, 0
      %s197 = sadd.s32 %s196, 1
      %s198 = scalar_select %p195, %s196, %s197
      %p201 = pneg %p195
      %p202 = scmp.eq.s32.totalorder %s18, 1
      %p203 = por %p201, %p202
      %p204 = scmp.ne.s32.totalorder %s196, %s199
      %p205 = scmp.eq.s32.totalorder %s18, 0
      %p206 = por %p204, %p205
      %p207 = scmp.ne.s32.totalorder %s196, %s199
      %p208 = scmp.eq.s32.totalorder %s23, 1
      %p209 = por %p207, %p208
      %p210 = scmp.ne.s32.totalorder %s199, %s200
      %p211 = scmp.eq.s32.totalorder %s23, 0
      %p212 = por %p210, %p211
      %p213 = scmp.ne.s32.totalorder %s199, %s200
      %p214 = scmp.eq.s32.totalorder %s24, 1
      %p215 = por %p213, %p214
      %p217 = scmp.ne.s32.totalorder %s200, %s216
      %p218 = scmp.eq.s32.totalorder %s24, 0
      %p219 = por %p217, %p218
      %p220 = scmp.le.s32.totalorder 1, %s18
      %p221 = scmp.lt.s32.totalorder %s18, 3
      %p222 = pnand %p220, %p221
      %p223 = pneg %p222
      // Predicated region
      $region9: #{tpu_custom_call.1} parent=5 // pred_check
        _
      $region10: #{tpu_custom_call.1} parent=5 // pred_check_branch
        %225 = sbr.rel (%p222) target = $region12
      $region11: #{tpu_custom_call.1} parent=5 // pred_region
        %s226 = ssub.s32 %s18, 1
        // Predicated region
        $region13: #{tpu_custom_call.1} parent=11 // pred_check
          %p227 = pneg %p51
        $region14: #{tpu_custom_call.1} parent=11 // pred_check_branch
          %229 = sbr.rel (%p227) target = $region16
        $region15: #{tpu_custom_call.1} parent=11 // pred_region
          %s231 = ssub.s32 64, 64
          %232 = vsyncadd [#allocation3], %s231
          %s234 = sshll.u32 [#allocation2], 4
          %s235 = int_to_ptr.vmem [resolvable:$true] %s234
          %237 = dma.hbm_to_vmem [thread:$0]  %s0, 64, %s235, [#allocation3]
        $region16: #{tpu_custom_call.1} parent=11 // pred_fallthru
          _
        // Predicated region
        $region17: #{tpu_custom_call.1} parent=11 // pred_check
          %p238 = pneg %p72
        $region18: #{tpu_custom_call.1} parent=11 // pred_check_branch
          %240 = sbr.rel (%p238) target = $region20
        $region19: #{tpu_custom_call.1} parent=11 // pred_region
          %s242 = ssub.s32 64, 64
          %243 = vsyncadd [#allocation6], %s242
          %s245 = sshll.u32 [#allocation5], 4
          %s246 = int_to_ptr.vmem [resolvable:$true] %s245
          %248 = dma.hbm_to_vmem [thread:$0]  %s1, 64, %s246, [#allocation6]
        $region20: #{tpu_custom_call.1} parent=11 // pred_fallthru
          _
      $region12: #{tpu_custom_call.1} parent=5 // pred_fallthru
        _
      %p249 = scmp.lt.s32.totalorder %s18, 2
      // Predicated region
      $region21: #{tpu_custom_call.1} parent=5 // pred_check
        %p250 = pneg %p249
      $region22: #{tpu_custom_call.1} parent=5 // pred_check_branch
        %252 = sbr.rel (%p250) target = $region24
      $region23: #{tpu_custom_call.1} parent=5 // pred_region
        // Predicated region
        $region25: #{tpu_custom_call.1} parent=23 // pred_check
          %p253 = pneg %p94
        $region26: #{tpu_custom_call.1} parent=23 // pred_check_branch
          %255 = sbr.rel (%p253) target = $region28
        $region27: #{tpu_custom_call.1} parent=23 // pred_region
          %s256 = sand.u32 %s18, 1
          %s257 = scalar_lea.sflag [#allocation3], %s256
          %s258 = sand.u32 %s84, 1
          %s259 = smul.addr %s258, 8
          %s260 = scalar_lea.vmem [#allocation7], %s259
          %s261 = smul.u32 2, %s26
          %s263 = ssub.s32 128, 128
          %264 = vsyncadd %s257, %s263
          %s265 = smul.addr %s25, 2
          %s266 = sadd.s32 %s261, %s265
          %s267 = smul.addr %s266, 64
          %s268 = scalar_lea.hbm %s2, %s267
          %s270 = sshll.u32 %s260, 4
          %s271 = int_to_ptr.vmem [resolvable:$true] %s270
          %273 = dma.hbm_to_vmem [thread:$0]  %s268, 128, %s271, %s257
        $region28: #{tpu_custom_call.1} parent=23 // pred_fallthru
          _
        // Predicated region
        $region29: #{tpu_custom_call.1} parent=23 // pred_check
          %p274 = pneg %p122
        $region30: #{tpu_custom_call.1} parent=23 // pred_check_branch
          %276 = sbr.rel (%p274) target = $region32
        $region31: #{tpu_custom_call.1} parent=23 // pred_region
          %s277 = sand.u32 %s18, 1
          %s278 = scalar_lea.sflag [#allocation3], %s277
          %s279 = sand.u32 %s112, 1
          %s280 = smul.addr %s279, 8
          %s281 = scalar_lea.vmem [#allocation8], %s280
          %s282 = smul.u32 2, %s26
          %s284 = ssub.s32 128, 128
          %285 = vsyncadd %s278, %s284
          %s286 = smul.addr %s25, 2
          %s287 = sadd.s32 %s282, %s286
          %s288 = smul.addr %s287, 64
          %s289 = scalar_lea.hbm %s3, %s288
          %s291 = sshll.u32 %s281, 4
          %s292 = int_to_ptr.vmem [resolvable:$true] %s291
          %294 = dma.hbm_to_vmem [thread:$0]  %s289, 128, %s292, %s278
        $region32: #{tpu_custom_call.1} parent=23 // pred_fallthru
          _
      $region24: #{tpu_custom_call.1} parent=5 // pred_fallthru
        _
      %p295 = scmp.le.s32.totalorder 1, %s18
      %p296 = scmp.lt.s32.totalorder %s18, 3
      %p297 = pnand %p295, %p296
      %p298 = pneg %p297
      // Predicated region
      $region33: #{tpu_custom_call.1} parent=5 // pred_check
        _
      $region34: #{tpu_custom_call.1} parent=5 // pred_check_branch
        %300 = sbr.rel (%p297) target = $region36
      $region35: #{tpu_custom_call.1} parent=5 // pred_region
        %s301 = ssub.s32 %s18, 1
        // Predicated region
        $region37: #{tpu_custom_call.1} parent=35 // pred_check
          %p302 = pneg %p51
        $region38: #{tpu_custom_call.1} parent=35 // pred_check_branch
          %304 = sbr.rel (%p302) target = $region40
        $region39: #{tpu_custom_call.1} parent=35 // pred_region
          %305 = dma.done [#allocation3], 64
        $region40: #{tpu_custom_call.1} parent=35 // pred_fallthru
          _
        // Predicated region
        $region41: #{tpu_custom_call.1} parent=35 // pred_check
          %p306 = pneg %p72
        $region42: #{tpu_custom_call.1} parent=35 // pred_check_branch
          %308 = sbr.rel (%p306) target = $region44
        $region43: #{tpu_custom_call.1} parent=35 // pred_region
          %309 = dma.done [#allocation6], 64
        $region44: #{tpu_custom_call.1} parent=35 // pred_fallthru
          _
        %s310 = sand.u32 %s23, 1
        %s311 = scalar_lea.sflag [#allocation3], %s310
        %s312 = sand.u32 %s87, 1
        %s313 = smul.addr %s312, 8
        %s314 = scalar_lea.vmem [#allocation7], %s313
        // Predicated region
        $region45: #{tpu_custom_call.1} parent=35 // pred_check
          %p315 = pneg %p100
        $region46: #{tpu_custom_call.1} parent=35 // pred_check_branch
          %317 = sbr.rel (%p315) target = $region48
        $region47: #{tpu_custom_call.1} parent=35 // pred_region
          %318 = dma.done %s311, 128
        $region48: #{tpu_custom_call.1} parent=35 // pred_fallthru
          _
        %s319 = sand.u32 %s23, 1
        %s320 = scalar_lea.sflag [#allocation3], %s319
        %s321 = sand.u32 %s115, 1
        %s322 = smul.addr %s321, 8
        %s323 = scalar_lea.vmem [#allocation8], %s322
        // Predicated region
        $region49: #{tpu_custom_call.1} parent=35 // pred_check
          %p324 = pneg %p128
        $region50: #{tpu_custom_call.1} parent=35 // pred_check_branch
          %326 = sbr.rel (%p324) target = $region52
        $region51: #{tpu_custom_call.1} parent=35 // pred_region
          %327 = dma.done %s320, 128
        $region52: #{tpu_custom_call.1} parent=35 // pred_fallthru
          _
        %p328 = pneg %p51
        %p329 = pneg %p48
        %p330 = pneg %p72
        %p331 = pneg %p69
        %s332 = sand.u32 %s23, 1
        %s333 = scalar_lea.sflag [#allocation3], %s332
        %s334 = sand.u32 %s87, 1
        %s335 = smul.addr %s334, 8
        %s336 = scalar_lea.vmem [#allocation7], %s335
        %p337 = pneg %p100
        %p338 = pneg %p97
        %s339 = sand.u32 %s23, 1
        %s340 = scalar_lea.sflag [#allocation3], %s339
        %s341 = sand.u32 %s115, 1
        %s342 = smul.addr %s341, 8
        %s343 = scalar_lea.vmem [#allocation8], %s342
        %p344 = pneg %p128
        %p345 = pneg %p125
        %p346 = pneg %p156
        %p347 = pneg %p153
        %s348 = sand.u32 %s143, 1
        %s349 = scalar_lea.sflag [#allocation4], %s348
        %s350 = sand.u32 %s143, 1
        %s351 = smul.addr %s350, 8
        %s352 = scalar_lea.vmem [#allocation9], %s351
        %p353 = pneg %p184
        %p354 = pneg %p181
        %p355 = scmp.lt.s32.totalorder %s27, 1
        %s356 = scalar_select %p355, %s27, 1
        %p357 = scmp.lt.s32.totalorder %s28, 0
        %s358 = scalar_select %p357, %s28, 0
        %s359 = sadd.s32 %s358, %s356
        %s360 = smul.addr %s359, 4
        %s361 = scalar_lea.vmem %s5, %s360
        %p362 = pneg %p212
        %p363 = pneg %p209
        %p364 = scmp.lt.s32.totalorder %s27, 1
        %s365 = scalar_select %p364, %s27, 1
        %p366 = scmp.lt.s32.totalorder %s28, 0
        %s367 = scalar_select %p366, %s28, 0
        %s368 = sadd.s32 %s367, %s365
        %s369 = smul.addr %s368, 4
        %s370 = scalar_lea.vmem %s6, %s369
        %s371 = smul.u32 2, %s28
        %s372 = smul.u32 2, %s28
        %s373 = smul.u32 2, %s28
        %p374 = scmp.lt.s32.totalorder %s27, 1
        %s375 = scalar_select %p374, %s27, 1
        %p376 = scmp.lt.s32.totalorder %s28, 0
        %s377 = scalar_select %p376, %s28, 0
        %s378 = sadd.s32 %s377, %s375
        %s379 = smul.addr %s378, 4
        %s380 = scalar_lea.vmem %s5, %s379
        %p381 = scmp.lt.s32.totalorder %s27, 1
        %s382 = scalar_select %p381, %s27, 1
        %p383 = scmp.lt.s32.totalorder %s28, 0
        %s384 = scalar_select %p383, %s28, 0
        %s385 = sadd.s32 %s384, %s382
        %s386 = smul.addr %s385, 4
        %s387 = scalar_lea.vmem %s6, %s386
        %v388 = vld [vmem:[%s314] sm:$0xff]
        %v389 = vld [vmem:[%s323] sm:$0xff]
        %v390 = vld [vmem:[#allocation2] sm:$0xf]
        %v391 = vld [vmem:[#allocation5] sm:$0xf]
        %v393 = vcombine.high %v389, %v389
        %vm394 = vcmask 31744
        %v396 = vsel %vm394, %v391, 0
        %vm398 = vcmask 1043456
        %v399 = vsel %vm398, %v389, 0
        %v401 = vsel %vm398, %v393, 0
        %403 = vmatprep.subr.mxu0 0.0
        %404 = vmatpush1.msra.mxu0 0.0
        %405 = vmatprep.subr.mxu0 0.0
        %406 = vmatpush1.msra.mxu0 0.0
        %407 = vmatprep.subr.mxu0 0.0
        %408 = vmatpush1.msra.mxu0 0.0
        %409 = vmatprep.subr.mxu0 0.0
        %410 = vmatpush1.msra.mxu0 0.0
        %411 = vmatprep.subr.mxu0 0.0
        %412 = vmatpush1.msra.mxu0 0.0
        %413 = vmatprep.subr.mxu0 0.0
        %414 = vmatpush1.msra.mxu0 0.0
        %415 = vmatprep.subr.mxu0 0.0
        %416 = vmatpush1.msra.mxu0 0.0
        %417 = vmatprep.subr.mxu0 0.0
        %418 = vmatpush1.msra.mxu0 0.0
        %419 = vmatprep.subr.mxu0 0.0
        %420 = vmatpush1.msra.mxu0 0.0
        %421 = vmatprep.subr.mxu0 0.0
        %422 = vmatpush1.msra.mxu0 0.0
        %423 = vmatprep.subr.mxu0 0.0
        %424 = vmatpush1.msra.mxu0 0.0
        %425 = vmatprep.subr.mxu0 0.0
        %426 = vmatpush1.msra.mxu0 0.0
        %427 = vmatprep.subr.mxu0 0.0
        %428 = vmatpush1.msra.mxu0 0.0
        %429 = vmatprep.subr.mxu0 0.0
        %430 = vmatpush1.msra.mxu0 0.0
        %431 = vmatprep.subr.mxu0 0.0
        %432 = vmatpush1.msra.mxu0 0.0
        %v433 = vand.u32 %v401, 4294901760
        %434 = vmatprep.subr.mxu0 %v433
        %v435 = vand.u32 %v399, 4294901760
        %436 = vmatpush1.msra.mxu0 %v435
        %437 = vmatprep.subr.mxu0 0.0
        %438 = vmatpush2.msra.mxu0 0.0
        %439 = vmatprep.subr.mxu0 0.0
        %440 = vmatpush2.msra.mxu0 0.0
        %441 = vmatprep.subr.mxu0 0.0
        %442 = vmatpush2.msra.mxu0 0.0
        %443 = vmatprep.subr.mxu0 0.0
        %444 = vmatpush2.msra.mxu0 0.0
        %445 = vmatprep.subr.mxu0 0.0
        %446 = vmatpush2.msra.mxu0 0.0
        %447 = vmatprep.subr.mxu0 0.0
        %448 = vmatpush2.msra.mxu0 0.0
        %449 = vmatprep.subr.mxu0 0.0
        %450 = vmatpush2.msra.mxu0 0.0
        %451 = vmatprep.subr.mxu0 0.0
        %452 = vmatpush2.msra.mxu0 0.0
        %453 = vmatprep.subr.mxu0 0.0
        %454 = vmatpush2.msra.mxu0 0.0
        %455 = vmatprep.subr.mxu0 0.0
        %456 = vmatpush2.msra.mxu0 0.0
        %457 = vmatprep.subr.mxu0 0.0
        %458 = vmatpush2.msra.mxu0 0.0
        %459 = vmatprep.subr.mxu0 0.0
        %460 = vmatpush2.msra.mxu0 0.0
        %461 = vmatprep.subr.mxu0 0.0
        %462 = vmatpush2.msra.mxu0 0.0
        %463 = vmatprep.subr.mxu0 0.0
        %464 = vmatpush2.msra.mxu0 0.0
        %465 = vmatprep.subr.mxu0 0.0
        %466 = vmatpush2.msra.mxu0 0.0
        %467 = vmatprep.subr.mxu0 0.0
        %468 = vmatpush2.msra.mxu0 0.0
        %469 = vmatprep.mubr.f32.mxu0 0.0
        %v470 = vand.u32 %v396, 4294901760
        %v471 = vsub.f32 %v396, %v470
        %v472 = vand.u32 %v471, 4294901760
        %v473 = vsub.f32 %v471, %v472
        %v474 = vand.u32 %v473, 4294901760
        %475 = vmatmul.mubr.f32.gmra.mxu0 %v474
        %v476 = vpop.f32.mrf.mxu0
        %v477 = vadd.f32 0.0, %v476
        %v478 = vpop.f32.mrf.mxu0
        %v479 = vadd.f32 0.0, %v478
        %480 = vdwg.mxu0
        %481 = vmatprep.subr.mxu0 0.0
        %482 = vmatpush1.msra.mxu0 0.0
        %483 = vmatprep.subr.mxu0 0.0
        %484 = vmatpush1.msra.mxu0 0.0
        %485 = vmatprep.subr.mxu0 0.0
        %486 = vmatpush1.msra.mxu0 0.0
        %487 = vmatprep.subr.mxu0 0.0
        %488 = vmatpush1.msra.mxu0 0.0
        %489 = vmatprep.subr.mxu0 0.0
        %490 = vmatpush1.msra.mxu0 0.0
        %491 = vmatprep.subr.mxu0 0.0
        %492 = vmatpush1.msra.mxu0 0.0
        %493 = vmatprep.subr.mxu0 0.0
        %494 = vmatpush1.msra.mxu0 0.0
        %495 = vmatprep.subr.mxu0 0.0
        %496 = vmatpush1.msra.mxu0 0.0
        %497 = vmatprep.subr.mxu0 0.0
        %498 = vmatpush1.msra.mxu0 0.0
        %499 = vmatprep.subr.mxu0 0.0
        %500 = vmatpush1.msra.mxu0 0.0
        %501 = vmatprep.subr.mxu0 0.0
        %502 = vmatpush1.msra.mxu0 0.0
        %503 = vmatprep.subr.mxu0 0.0
        %504 = vmatpush1.msra.mxu0 0.0
        %505 = vmatprep.subr.mxu0 0.0
        %506 = vmatpush1.msra.mxu0 0.0
        %507 = vmatprep.subr.mxu0 0.0
        %508 = vmatpush1.msra.mxu0 0.0
        %509 = vmatprep.subr.mxu0 0.0
        %510 = vmatpush1.msra.mxu0 0.0
        %v511 = vand.u32 %v401, 4294901760
        %v512 = vsub.f32 %v401, %v511
        %v513 = vand.u32 %v512, 4294901760
        %v514 = vsub.f32 %v512, %v513
        %v515 = vand.u32 %v514, 4294901760
        %516 = vmatprep.subr.mxu0 %v515
        %v517 = vand.u32 %v399, 4294901760
        %v518 = vsub.f32 %v399, %v517
        %v519 = vand.u32 %v518, 4294901760
        %v520 = vsub.f32 %v518, %v519
        %v521 = vand.u32 %v520, 4294901760
        %522 = vmatpush1.msra.mxu0 %v521
        %523 = vmatprep.subr.mxu0 0.0
        %524 = vmatpush2.msra.mxu0 0.0
        %525 = vmatprep.subr.mxu0 0.0
        %526 = vmatpush2.msra.mxu0 0.0
        %527 = vmatprep.subr.mxu0 0.0
        %528 = vmatpush2.msra.mxu0 0.0
        %529 = vmatprep.subr.mxu0 0.0
        %530 = vmatpush2.msra.mxu0 0.0
        %531 = vmatprep.subr.mxu0 0.0
        %532 = vmatpush2.msra.mxu0 0.0
        %533 = vmatprep.subr.mxu0 0.0
        %534 = vmatpush2.msra.mxu0 0.0
        %535 = vmatprep.subr.mxu0 0.0
        %536 = vmatpush2.msra.mxu0 0.0
        %537 = vmatprep.subr.mxu0 0.0
        %538 = vmatpush2.msra.mxu0 0.0
        %539 = vmatprep.subr.mxu0 0.0
        %540 = vmatpush2.msra.mxu0 0.0
        %541 = vmatprep.subr.mxu0 0.0
        %542 = vmatpush2.msra.mxu0 0.0
        %543 = vmatprep.subr.mxu0 0.0
        %544 = vmatpush2.msra.mxu0 0.0
        %545 = vmatprep.subr.mxu0 0.0
        %546 = vmatpush2.msra.mxu0 0.0
        %547 = vmatprep.subr.mxu0 0.0
        %548 = vmatpush2.msra.mxu0 0.0
        %549 = vmatprep.subr.mxu0 0.0
        %550 = vmatpush2.msra.mxu0 0.0
        %551 = vmatprep.subr.mxu0 0.0
        %552 = vmatpush2.msra.mxu0 0.0
        %553 = vmatprep.subr.mxu0 0.0
        %554 = vmatpush2.msra.mxu0 0.0
        %555 = vmatprep.mubr.f32.mxu0 0.0
        %v556 = vand.u32 %v396, 4294901760
        %557 = vmatmul.mubr.f32.gmra.mxu0 %v556
        %v558 = vpop.f32.mrf.mxu0
        %v559 = vadd.f32 %v477, %v558
        %v560 = vpop.f32.mrf.mxu0
        %v561 = vadd.f32 %v479, %v560
        %562 = vdwg.mxu0
        %563 = vmatprep.subr.mxu0 0.0
        %564 = vmatpush1.msra.mxu0 0.0
        %565 = vmatprep.subr.mxu0 0.0
        %566 = vmatpush1.msra.mxu0 0.0
        %567 = vmatprep.subr.mxu0 0.0
        %568 = vmatpush1.msra.mxu0 0.0
        %569 = vmatprep.subr.mxu0 0.0
        %570 = vmatpush1.msra.mxu0 0.0
        %571 = vmatprep.subr.mxu0 0.0
        %572 = vmatpush1.msra.mxu0 0.0
        %573 = vmatprep.subr.mxu0 0.0
        %574 = vmatpush1.msra.mxu0 0.0
        %575 = vmatprep.subr.mxu0 0.0
        %576 = vmatpush1.msra.mxu0 0.0
        %577 = vmatprep.subr.mxu0 0.0
        %578 = vmatpush1.msra.mxu0 0.0
        %579 = vmatprep.subr.mxu0 0.0
        %580 = vmatpush1.msra.mxu0 0.0
        %581 = vmatprep.subr.mxu0 0.0
        %582 = vmatpush1.msra.mxu0 0.0
        %583 = vmatprep.subr.mxu0 0.0
        %584 = vmatpush1.msra.mxu0 0.0
        %585 = vmatprep.subr.mxu0 0.0
        %586 = vmatpush1.msra.mxu0 0.0
        %587 = vmatprep.subr.mxu0 0.0
        %588 = vmatpush1.msra.mxu0 0.0
        %589 = vmatprep.subr.mxu0 0.0
        %590 = vmatpush1.msra.mxu0 0.0
        %591 = vmatprep.subr.mxu0 0.0
        %592 = vmatpush1.msra.mxu0 0.0
        %v593 = vand.u32 %v401, 4294901760
        %v594 = vsub.f32 %v401, %v593
        %595 = vmatprep.subr.mxu0 %v594
        %v596 = vand.u32 %v399, 4294901760
        %v597 = vsub.f32 %v399, %v596
        %598 = vmatpush1.msra.mxu0 %v597
        %599 = vmatprep.subr.mxu0 0.0
        %600 = vmatpush2.msra.mxu0 0.0
        %601 = vmatprep.subr.mxu0 0.0
        %602 = vmatpush2.msra.mxu0 0.0
        %603 = vmatprep.subr.mxu0 0.0
        %604 = vmatpush2.msra.mxu0 0.0
        %605 = vmatprep.subr.mxu0 0.0
        %606 = vmatpush2.msra.mxu0 0.0
        %607 = vmatprep.subr.mxu0 0.0
        %608 = vmatpush2.msra.mxu0 0.0
        %609 = vmatprep.subr.mxu0 0.0
        %610 = vmatpush2.msra.mxu0 0.0
        %611 = vmatprep.subr.mxu0 0.0
        %612 = vmatpush2.msra.mxu0 0.0
        %613 = vmatprep.subr.mxu0 0.0
        %614 = vmatpush2.msra.mxu0 0.0
        %615 = vmatprep.subr.mxu0 0.0
        %616 = vmatpush2.msra.mxu0 0.0
        %617 = vmatprep.subr.mxu0 0.0
        %618 = vmatpush2.msra.mxu0 0.0
        %619 = vmatprep.subr.mxu0 0.0
        %620 = vmatpush2.msra.mxu0 0.0
        %621 = vmatprep.subr.mxu0 0.0
        %622 = vmatpush2.msra.mxu0 0.0
        %623 = vmatprep.subr.mxu0 0.0
        %624 = vmatpush2.msra.mxu0 0.0
        %625 = vmatprep.subr.mxu0 0.0
        %626 = vmatpush2.msra.mxu0 0.0
        %627 = vmatprep.subr.mxu0 0.0
        %628 = vmatpush2.msra.mxu0 0.0
        %629 = vmatprep.subr.mxu0 0.0
        %630 = vmatpush2.msra.mxu0 0.0
        %631 = vmatprep.mubr.f32.mxu0 0.0
        %v632 = vand.u32 %v396, 4294901760
        %v633 = vsub.f32 %v396, %v632
        %634 = vmatmul.mubr.f32.gmra.mxu0 %v633
        %v635 = vpop.f32.mrf.mxu0
        %v636 = vadd.f32 %v559, %v635
        %v637 = vpop.f32.mrf.mxu0
        %v638 = vadd.f32 %v561, %v637
        %639 = vdwg.mxu0
        %640 = vmatprep.subr.mxu0 0.0
        %641 = vmatpush1.msra.mxu0 0.0
        %642 = vmatprep.subr.mxu0 0.0
        %643 = vmatpush1.msra.mxu0 0.0
        %644 = vmatprep.subr.mxu0 0.0
        %645 = vmatpush1.msra.mxu0 0.0
        %646 = vmatprep.subr.mxu0 0.0
        %647 = vmatpush1.msra.mxu0 0.0
        %648 = vmatprep.subr.mxu0 0.0
        %649 = vmatpush1.msra.mxu0 0.0
        %650 = vmatprep.subr.mxu0 0.0
        %651 = vmatpush1.msra.mxu0 0.0
        %652 = vmatprep.subr.mxu0 0.0
        %653 = vmatpush1.msra.mxu0 0.0
        %654 = vmatprep.subr.mxu0 0.0
        %655 = vmatpush1.msra.mxu0 0.0
        %656 = vmatprep.subr.mxu0 0.0
        %657 = vmatpush1.msra.mxu0 0.0
        %658 = vmatprep.subr.mxu0 0.0
        %659 = vmatpush1.msra.mxu0 0.0
        %660 = vmatprep.subr.mxu0 0.0
        %661 = vmatpush1.msra.mxu0 0.0
        %662 = vmatprep.subr.mxu0 0.0
        %663 = vmatpush1.msra.mxu0 0.0
        %664 = vmatprep.subr.mxu0 0.0
        %665 = vmatpush1.msra.mxu0 0.0
        %666 = vmatprep.subr.mxu0 0.0
        %667 = vmatpush1.msra.mxu0 0.0
        %668 = vmatprep.subr.mxu0 0.0
        %669 = vmatpush1.msra.mxu0 0.0
        %v670 = vand.u32 %v401, 4294901760
        %671 = vmatprep.subr.mxu0 %v670
        %v672 = vand.u32 %v399, 4294901760
        %673 = vmatpush1.msra.mxu0 %v672
        %674 = vmatprep.subr.mxu0 0.0
        %675 = vmatpush2.msra.mxu0 0.0
        %676 = vmatprep.subr.mxu0 0.0
        %677 = vmatpush2.msra.mxu0 0.0
        %678 = vmatprep.subr.mxu0 0.0
        %679 = vmatpush2.msra.mxu0 0.0
        %680 = vmatprep.subr.mxu0 0.0
        %681 = vmatpush2.msra.mxu0 0.0
        %682 = vmatprep.subr.mxu0 0.0
        %683 = vmatpush2.msra.mxu0 0.0
        %684 = vmatprep.subr.mxu0 0.0
        %685 = vmatpush2.msra.mxu0 0.0
        %686 = vmatprep.subr.mxu0 0.0
        %687 = vmatpush2.msra.mxu0 0.0
        %688 = vmatprep.subr.mxu0 0.0
        %689 = vmatpush2.msra.mxu0 0.0
        %690 = vmatprep.subr.mxu0 0.0
        %691 = vmatpush2.msra.mxu0 0.0
        %692 = vmatprep.subr.mxu0 0.0
        %693 = vmatpush2.msra.mxu0 0.0
        %694 = vmatprep.subr.mxu0 0.0
        %695 = vmatpush2.msra.mxu0 0.0
        %696 = vmatprep.subr.mxu0 0.0
        %697 = vmatpush2.msra.mxu0 0.0
        %698 = vmatprep.subr.mxu0 0.0
        %699 = vmatpush2.msra.mxu0 0.0
        %700 = vmatprep.subr.mxu0 0.0
        %701 = vmatpush2.msra.mxu0 0.0
        %702 = vmatprep.subr.mxu0 0.0
        %703 = vmatpush2.msra.mxu0 0.0
        %704 = vmatprep.subr.mxu0 0.0
        %705 = vmatpush2.msra.mxu0 0.0
        %706 = vmatprep.mubr.f32.mxu0 0.0
        %v707 = vand.u32 %v396, 4294901760
        %v708 = vsub.f32 %v396, %v707
        %v709 = vand.u32 %v708, 4294901760
        %710 = vmatmul.mubr.f32.gmra.mxu0 %v709
        %v711 = vpop.f32.mrf.mxu0
        %v712 = vadd.f32 %v636, %v711
        %v713 = vpop.f32.mrf.mxu0
        %v714 = vadd.f32 %v638, %v713
        %715 = vdwg.mxu0
        %716 = vmatprep.subr.mxu0 0.0
        %717 = vmatpush1.msra.mxu0 0.0
        %718 = vmatprep.subr.mxu0 0.0
        %719 = vmatpush1.msra.mxu0 0.0
        %720 = vmatprep.subr.mxu0 0.0
        %721 = vmatpush1.msra.mxu0 0.0
        %722 = vmatprep.subr.mxu0 0.0
        %723 = vmatpush1.msra.mxu0 0.0
        %724 = vmatprep.subr.mxu0 0.0
        %725 = vmatpush1.msra.mxu0 0.0
        %726 = vmatprep.subr.mxu0 0.0
        %727 = vmatpush1.msra.mxu0 0.0
        %728 = vmatprep.subr.mxu0 0.0
        %729 = vmatpush1.msra.mxu0 0.0
        %730 = vmatprep.subr.mxu0 0.0
        %731 = vmatpush1.msra.mxu0 0.0
        %732 = vmatprep.subr.mxu0 0.0
        %733 = vmatpush1.msra.mxu0 0.0
        %734 = vmatprep.subr.mxu0 0.0
        %735 = vmatpush1.msra.mxu0 0.0
        %736 = vmatprep.subr.mxu0 0.0
        %737 = vmatpush1.msra.mxu0 0.0
        %738 = vmatprep.subr.mxu0 0.0
        %739 = vmatpush1.msra.mxu0 0.0
        %740 = vmatprep.subr.mxu0 0.0
        %741 = vmatpush1.msra.mxu0 0.0
        %742 = vmatprep.subr.mxu0 0.0
        %743 = vmatpush1.msra.mxu0 0.0
        %744 = vmatprep.subr.mxu0 0.0
        %745 = vmatpush1.msra.mxu0 0.0
        %v746 = vand.u32 %v401, 4294901760
        %v747 = vsub.f32 %v401, %v746
        %v748 = vand.u32 %v747, 4294901760
        %749 = vmatprep.subr.mxu0 %v748
        %v750 = vand.u32 %v399, 4294901760
        %v751 = vsub.f32 %v399, %v750
        %v752 = vand.u32 %v751, 4294901760
        %753 = vmatpush1.msra.mxu0 %v752
        %754 = vmatprep.subr.mxu0 0.0
        %755 = vmatpush2.msra.mxu0 0.0
        %756 = vmatprep.subr.mxu0 0.0
        %757 = vmatpush2.msra.mxu0 0.0
        %758 = vmatprep.subr.mxu0 0.0
        %759 = vmatpush2.msra.mxu0 0.0
        %760 = vmatprep.subr.mxu0 0.0
        %761 = vmatpush2.msra.mxu0 0.0
        %762 = vmatprep.subr.mxu0 0.0
        %763 = vmatpush2.msra.mxu0 0.0
        %764 = vmatprep.subr.mxu0 0.0
        %765 = vmatpush2.msra.mxu0 0.0
        %766 = vmatprep.subr.mxu0 0.0
        %767 = vmatpush2.msra.mxu0 0.0
        %768 = vmatprep.subr.mxu0 0.0
        %769 = vmatpush2.msra.mxu0 0.0
        %770 = vmatprep.subr.mxu0 0.0
        %771 = vmatpush2.msra.mxu0 0.0
        %772 = vmatprep.subr.mxu0 0.0
        %773 = vmatpush2.msra.mxu0 0.0
        %774 = vmatprep.subr.mxu0 0.0
        %775 = vmatpush2.msra.mxu0 0.0
        %776 = vmatprep.subr.mxu0 0.0
        %777 = vmatpush2.msra.mxu0 0.0
        %778 = vmatprep.subr.mxu0 0.0
        %779 = vmatpush2.msra.mxu0 0.0
        %780 = vmatprep.subr.mxu0 0.0
        %781 = vmatpush2.msra.mxu0 0.0
        %782 = vmatprep.subr.mxu0 0.0
        %783 = vmatpush2.msra.mxu0 0.0
        %784 = vmatprep.subr.mxu0 0.0
        %785 = vmatpush2.msra.mxu0 0.0
        %786 = vmatprep.mubr.f32.mxu0 0.0
        %v787 = vand.u32 %v396, 4294901760
        %788 = vmatmul.mubr.f32.gmra.mxu0 %v787
        %v789 = vpop.f32.mrf.mxu0
        %v790 = vadd.f32 %v712, %v789
        %v791 = vpop.f32.mrf.mxu0
        %v792 = vadd.f32 %v714, %v791
        %793 = vdwg.mxu0
        %794 = vmatprep.subr.mxu0 0.0
        %795 = vmatpush1.msra.mxu0 0.0
        %796 = vmatprep.subr.mxu0 0.0
        %797 = vmatpush1.msra.mxu0 0.0
        %798 = vmatprep.subr.mxu0 0.0
        %799 = vmatpush1.msra.mxu0 0.0
        %800 = vmatprep.subr.mxu0 0.0
        %801 = vmatpush1.msra.mxu0 0.0
        %802 = vmatprep.subr.mxu0 0.0
        %803 = vmatpush1.msra.mxu0 0.0
        %804 = vmatprep.subr.mxu0 0.0
        %805 = vmatpush1.msra.mxu0 0.0
        %806 = vmatprep.subr.mxu0 0.0
        %807 = vmatpush1.msra.mxu0 0.0
        %808 = vmatprep.subr.mxu0 0.0
        %809 = vmatpush1.msra.mxu0 0.0
        %810 = vmatprep.subr.mxu0 0.0
        %811 = vmatpush1.msra.mxu0 0.0
        %812 = vmatprep.subr.mxu0 0.0
        %813 = vmatpush1.msra.mxu0 0.0
        %814 = vmatprep.subr.mxu0 0.0
        %815 = vmatpush1.msra.mxu0 0.0
        %816 = vmatprep.subr.mxu0 0.0
        %817 = vmatpush1.msra.mxu0 0.0
        %818 = vmatprep.subr.mxu0 0.0
        %819 = vmatpush1.msra.mxu0 0.0
        %820 = vmatprep.subr.mxu0 0.0
        %821 = vmatpush1.msra.mxu0 0.0
        %822 = vmatprep.subr.mxu0 0.0
        %823 = vmatpush1.msra.mxu0 0.0
        %v824 = vand.u32 %v401, 4294901760
        %825 = vmatprep.subr.mxu0 %v824
        %v826 = vand.u32 %v399, 4294901760
        %827 = vmatpush1.msra.mxu0 %v826
        %828 = vmatprep.subr.mxu0 0.0
        %829 = vmatpush2.msra.mxu0 0.0
        %830 = vmatprep.subr.mxu0 0.0
        %831 = vmatpush2.msra.mxu0 0.0
        %832 = vmatprep.subr.mxu0 0.0
        %833 = vmatpush2.msra.mxu0 0.0
        %834 = vmatprep.subr.mxu0 0.0
        %835 = vmatpush2.msra.mxu0 0.0
        %836 = vmatprep.subr.mxu0 0.0
        %837 = vmatpush2.msra.mxu0 0.0
        %838 = vmatprep.subr.mxu0 0.0
        %839 = vmatpush2.msra.mxu0 0.0
        %840 = vmatprep.subr.mxu0 0.0
        %841 = vmatpush2.msra.mxu0 0.0
        %842 = vmatprep.subr.mxu0 0.0
        %843 = vmatpush2.msra.mxu0 0.0
        %844 = vmatprep.subr.mxu0 0.0
        %845 = vmatpush2.msra.mxu0 0.0
        %846 = vmatprep.subr.mxu0 0.0
        %847 = vmatpush2.msra.mxu0 0.0
        %848 = vmatprep.subr.mxu0 0.0
        %849 = vmatpush2.msra.mxu0 0.0
        %850 = vmatprep.subr.mxu0 0.0
        %851 = vmatpush2.msra.mxu0 0.0
        %852 = vmatprep.subr.mxu0 0.0
        %853 = vmatpush2.msra.mxu0 0.0
        %854 = vmatprep.subr.mxu0 0.0
        %855 = vmatpush2.msra.mxu0 0.0
        %856 = vmatprep.subr.mxu0 0.0
        %857 = vmatpush2.msra.mxu0 0.0
        %858 = vmatprep.subr.mxu0 0.0
        %859 = vmatpush2.msra.mxu0 0.0
        %860 = vmatprep.mubr.f32.mxu0 0.0
        %v861 = vand.u32 %v396, 4294901760
        %862 = vmatmul.mubr.f32.gmra.mxu0 %v861
        %v863 = vpop.f32.mrf.mxu0
        %v864 = vadd.f32 %v790, %v863
        %v865 = vpop.f32.mrf.mxu0
        %v866 = vadd.f32 %v792, %v865
        %867 = vdwg.mxu0
        %v869 = vcombine.high %v388, %v388
        %v871 = vsel %vm394, %v390, 0
        %v873 = vsel %vm398, %v388, 0
        %v875 = vsel %vm398, %v869, 0
        %877 = vmatprep.subr.mxu0 0.0
        %878 = vmatpush1.msra.mxu0 0.0
        %879 = vmatprep.subr.mxu0 0.0
        %880 = vmatpush1.msra.mxu0 0.0
        %881 = vmatprep.subr.mxu0 0.0
        %882 = vmatpush1.msra.mxu0 0.0
        %883 = vmatprep.subr.mxu0 0.0
        %884 = vmatpush1.msra.mxu0 0.0
        %885 = vmatprep.subr.mxu0 0.0
        %886 = vmatpush1.msra.mxu0 0.0
        %887 = vmatprep.subr.mxu0 0.0
        %888 = vmatpush1.msra.mxu0 0.0
        %889 = vmatprep.subr.mxu0 0.0
        %890 = vmatpush1.msra.mxu0 0.0
        %891 = vmatprep.subr.mxu0 0.0
        %892 = vmatpush1.msra.mxu0 0.0
        %893 = vmatprep.subr.mxu0 0.0
        %894 = vmatpush1.msra.mxu0 0.0
        %895 = vmatprep.subr.mxu0 0.0
        %896 = vmatpush1.msra.mxu0 0.0
        %897 = vmatprep.subr.mxu0 0.0
        %898 = vmatpush1.msra.mxu0 0.0
        %899 = vmatprep.subr.mxu0 0.0
        %900 = vmatpush1.msra.mxu0 0.0
        %901 = vmatprep.subr.mxu0 0.0
        %902 = vmatpush1.msra.mxu0 0.0
        %903 = vmatprep.subr.mxu0 0.0
        %904 = vmatpush1.msra.mxu0 0.0
        %905 = vmatprep.subr.mxu0 0.0
        %906 = vmatpush1.msra.mxu0 0.0
        %v907 = vand.u32 %v875, 4294901760
        %908 = vmatprep.subr.mxu0 %v907
        %v909 = vand.u32 %v873, 4294901760
        %910 = vmatpush1.msra.mxu0 %v909
        %911 = vmatprep.subr.mxu0 0.0
        %912 = vmatpush2.msra.mxu0 0.0
        %913 = vmatprep.subr.mxu0 0.0
        %914 = vmatpush2.msra.mxu0 0.0
        %915 = vmatprep.subr.mxu0 0.0
        %916 = vmatpush2.msra.mxu0 0.0
        %917 = vmatprep.subr.mxu0 0.0
        %918 = vmatpush2.msra.mxu0 0.0
        %919 = vmatprep.subr.mxu0 0.0
        %920 = vmatpush2.msra.mxu0 0.0
        %921 = vmatprep.subr.mxu0 0.0
        %922 = vmatpush2.msra.mxu0 0.0
        %923 = vmatprep.subr.mxu0 0.0
        %924 = vmatpush2.msra.mxu0 0.0
        %925 = vmatprep.subr.mxu0 0.0
        %926 = vmatpush2.msra.mxu0 0.0
        %927 = vmatprep.subr.mxu0 0.0
        %928 = vmatpush2.msra.mxu0 0.0
        %929 = vmatprep.subr.mxu0 0.0
        %930 = vmatpush2.msra.mxu0 0.0
        %931 = vmatprep.subr.mxu0 0.0
        %932 = vmatpush2.msra.mxu0 0.0
        %933 = vmatprep.subr.mxu0 0.0
        %934 = vmatpush2.msra.mxu0 0.0
        %935 = vmatprep.subr.mxu0 0.0
        %936 = vmatpush2.msra.mxu0 0.0
        %937 = vmatprep.subr.mxu0 0.0
        %938 = vmatpush2.msra.mxu0 0.0
        %939 = vmatprep.subr.mxu0 0.0
        %940 = vmatpush2.msra.mxu0 0.0
        %941 = vmatprep.subr.mxu0 0.0
        %942 = vmatpush2.msra.mxu0 0.0
        %943 = vmatprep.mubr.f32.mxu0 0.0
        %v944 = vand.u32 %v871, 4294901760
        %v945 = vsub.f32 %v871, %v944
        %v946 = vand.u32 %v945, 4294901760
        %v947 = vsub.f32 %v945, %v946
        %v948 = vand.u32 %v947, 4294901760
        %949 = vmatmul.mubr.f32.gmra.mxu0 %v948
        %v950 = vpop.f32.mrf.mxu0
        %v951 = vadd.f32 %v864, %v950
        %v952 = vpop.f32.mrf.mxu0
        %v953 = vadd.f32 %v866, %v952
        %954 = vdwg.mxu0
        %955 = vmatprep.subr.mxu0 0.0
        %956 = vmatpush1.msra.mxu0 0.0
        %957 = vmatprep.subr.mxu0 0.0
        %958 = vmatpush1.msra.mxu0 0.0
        %959 = vmatprep.subr.mxu0 0.0
        %960 = vmatpush1.msra.mxu0 0.0
        %961 = vmatprep.subr.mxu0 0.0
        %962 = vmatpush1.msra.mxu0 0.0
        %963 = vmatprep.subr.mxu0 0.0
        %964 = vmatpush1.msra.mxu0 0.0
        %965 = vmatprep.subr.mxu0 0.0
        %966 = vmatpush1.msra.mxu0 0.0
        %967 = vmatprep.subr.mxu0 0.0
        %968 = vmatpush1.msra.mxu0 0.0
        %969 = vmatprep.subr.mxu0 0.0
        %970 = vmatpush1.msra.mxu0 0.0
        %971 = vmatprep.subr.mxu0 0.0
        %972 = vmatpush1.msra.mxu0 0.0
        %973 = vmatprep.subr.mxu0 0.0
        %974 = vmatpush1.msra.mxu0 0.0
        %975 = vmatprep.subr.mxu0 0.0
        %976 = vmatpush1.msra.mxu0 0.0
        %977 = vmatprep.subr.mxu0 0.0
        %978 = vmatpush1.msra.mxu0 0.0
        %979 = vmatprep.subr.mxu0 0.0
        %980 = vmatpush1.msra.mxu0 0.0
        %981 = vmatprep.subr.mxu0 0.0
        %982 = vmatpush1.msra.mxu0 0.0
        %983 = vmatprep.subr.mxu0 0.0
        %984 = vmatpush1.msra.mxu0 0.0
        %v985 = vand.u32 %v875, 4294901760
        %v986 = vsub.f32 %v875, %v985
        %v987 = vand.u32 %v986, 4294901760
        %v988 = vsub.f32 %v986, %v987
        %v989 = vand.u32 %v988, 4294901760
        %990 = vmatprep.subr.mxu0 %v989
        %v991 = vand.u32 %v873, 4294901760
        %v992 = vsub.f32 %v873, %v991
        %v993 = vand.u32 %v992, 4294901760
        %v994 = vsub.f32 %v992, %v993
        %v995 = vand.u32 %v994, 4294901760
        %996 = vmatpush1.msra.mxu0 %v995
        %997 = vmatprep.subr.mxu0 0.0
        %998 = vmatpush2.msra.mxu0 0.0
        %999 = vmatprep.subr.mxu0 0.0
        %1000 = vmatpush2.msra.mxu0 0.0
        %1001 = vmatprep.subr.mxu0 0.0
        %1002 = vmatpush2.msra.mxu0 0.0
        %1003 = vmatprep.subr.mxu0 0.0
        %1004 = vmatpush2.msra.mxu0 0.0
        %1005 = vmatprep.subr.mxu0 0.0
        %1006 = vmatpush2.msra.mxu0 0.0
        %1007 = vmatprep.subr.mxu0 0.0
        %1008 = vmatpush2.msra.mxu0 0.0
        %1009 = vmatprep.subr.mxu0 0.0
        %1010 = vmatpush2.msra.mxu0 0.0
        %1011 = vmatprep.subr.mxu0 0.0
        %1012 = vmatpush2.msra.mxu0 0.0
        %1013 = vmatprep.subr.mxu0 0.0
        %1014 = vmatpush2.msra.mxu0 0.0
        %1015 = vmatprep.subr.mxu0 0.0
        %1016 = vmatpush2.msra.mxu0 0.0
        %1017 = vmatprep.subr.mxu0 0.0
        %1018 = vmatpush2.msra.mxu0 0.0
        %1019 = vmatprep.subr.mxu0 0.0
        %1020 = vmatpush2.msra.mxu0 0.0
        %1021 = vmatprep.subr.mxu0 0.0
        %1022 = vmatpush2.msra.mxu0 0.0
        %1023 = vmatprep.subr.mxu0 0.0
        %1024 = vmatpush2.msra.mxu0 0.0
        %1025 = vmatprep.subr.mxu0 0.0
        %1026 = vmatpush2.msra.mxu0 0.0
        %1027 = vmatprep.subr.mxu0 0.0
        %1028 = vmatpush2.msra.mxu0 0.0
        %1029 = vmatprep.mubr.f32.mxu0 0.0
        %v1030 = vand.u32 %v871, 4294901760
        %1031 = vmatmul.mubr.f32.gmra.mxu0 %v1030
        %v1032 = vpop.f32.mrf.mxu0
        %v1033 = vadd.f32 %v951, %v1032
        %v1034 = vpop.f32.mrf.mxu0
        %v1035 = vadd.f32 %v953, %v1034
        %1036 = vdwg.mxu0
        %1037 = vmatprep.subr.mxu0 0.0
        %1038 = vmatpush1.msra.mxu0 0.0
        %1039 = vmatprep.subr.mxu0 0.0
        %1040 = vmatpush1.msra.mxu0 0.0
        %1041 = vmatprep.subr.mxu0 0.0
        %1042 = vmatpush1.msra.mxu0 0.0
        %1043 = vmatprep.subr.mxu0 0.0
        %1044 = vmatpush1.msra.mxu0 0.0
        %1045 = vmatprep.subr.mxu0 0.0
        %1046 = vmatpush1.msra.mxu0 0.0
        %1047 = vmatprep.subr.mxu0 0.0
        %1048 = vmatpush1.msra.mxu0 0.0
        %1049 = vmatprep.subr.mxu0 0.0
        %1050 = vmatpush1.msra.mxu0 0.0
        %1051 = vmatprep.subr.mxu0 0.0
        %1052 = vmatpush1.msra.mxu0 0.0
        %1053 = vmatprep.subr.mxu0 0.0
        %1054 = vmatpush1.msra.mxu0 0.0
        %1055 = vmatprep.subr.mxu0 0.0
        %1056 = vmatpush1.msra.mxu0 0.0
        %1057 = vmatprep.subr.mxu0 0.0
        %1058 = vmatpush1.msra.mxu0 0.0
        %1059 = vmatprep.subr.mxu0 0.0
        %1060 = vmatpush1.msra.mxu0 0.0
        %1061 = vmatprep.subr.mxu0 0.0
        %1062 = vmatpush1.msra.mxu0 0.0
        %1063 = vmatprep.subr.mxu0 0.0
        %1064 = vmatpush1.msra.mxu0 0.0
        %1065 = vmatprep.subr.mxu0 0.0
        %1066 = vmatpush1.msra.mxu0 0.0
        %v1067 = vand.u32 %v875, 4294901760
        %v1068 = vsub.f32 %v875, %v1067
        %1069 = vmatprep.subr.mxu0 %v1068
        %v1070 = vand.u32 %v873, 4294901760
        %v1071 = vsub.f32 %v873, %v1070
        %1072 = vmatpush1.msra.mxu0 %v1071
        %1073 = vmatprep.subr.mxu0 0.0
        %1074 = vmatpush2.msra.mxu0 0.0
        %1075 = vmatprep.subr.mxu0 0.0
        %1076 = vmatpush2.msra.mxu0 0.0
        %1077 = vmatprep.subr.mxu0 0.0
        %1078 = vmatpush2.msra.mxu0 0.0
        %1079 = vmatprep.subr.mxu0 0.0
        %1080 = vmatpush2.msra.mxu0 0.0
        %1081 = vmatprep.subr.mxu0 0.0
        %1082 = vmatpush2.msra.mxu0 0.0
        %1083 = vmatprep.subr.mxu0 0.0
        %1084 = vmatpush2.msra.mxu0 0.0
        %1085 = vmatprep.subr.mxu0 0.0
        %1086 = vmatpush2.msra.mxu0 0.0
        %1087 = vmatprep.subr.mxu0 0.0
        %1088 = vmatpush2.msra.mxu0 0.0
        %1089 = vmatprep.subr.mxu0 0.0
        %1090 = vmatpush2.msra.mxu0 0.0
        %1091 = vmatprep.subr.mxu0 0.0
        %1092 = vmatpush2.msra.mxu0 0.0
        %1093 = vmatprep.subr.mxu0 0.0
        %1094 = vmatpush2.msra.mxu0 0.0
        %1095 = vmatprep.subr.mxu0 0.0
        %1096 = vmatpush2.msra.mxu0 0.0
        %1097 = vmatprep.subr.mxu0 0.0
        %1098 = vmatpush2.msra.mxu0 0.0
        %1099 = vmatprep.subr.mxu0 0.0
        %1100 = vmatpush2.msra.mxu0 0.0
        %1101 = vmatprep.subr.mxu0 0.0
        %1102 = vmatpush2.msra.mxu0 0.0
        %1103 = vmatprep.subr.mxu0 0.0
        %1104 = vmatpush2.msra.mxu0 0.0
        %1105 = vmatprep.mubr.f32.mxu0 0.0
        %v1106 = vand.u32 %v871, 4294901760
        %v1107 = vsub.f32 %v871, %v1106
        %1108 = vmatmul.mubr.f32.gmra.mxu0 %v1107
        %v1109 = vpop.f32.mrf.mxu0
        %v1110 = vadd.f32 %v1033, %v1109
        %v1111 = vpop.f32.mrf.mxu0
        %v1112 = vadd.f32 %v1035, %v1111
        %1113 = vdwg.mxu0
        %1114 = vmatprep.subr.mxu0 0.0
        %1115 = vmatpush1.msra.mxu0 0.0
        %1116 = vmatprep.subr.mxu0 0.0
        %1117 = vmatpush1.msra.mxu0 0.0
        %1118 = vmatprep.subr.mxu0 0.0
        %1119 = vmatpush1.msra.mxu0 0.0
        %1120 = vmatprep.subr.mxu0 0.0
        %1121 = vmatpush1.msra.mxu0 0.0
        %1122 = vmatprep.subr.mxu0 0.0
        %1123 = vmatpush1.msra.mxu0 0.0
        %1124 = vmatprep.subr.mxu0 0.0
        %1125 = vmatpush1.msra.mxu0 0.0
        %1126 = vmatprep.subr.mxu0 0.0
        %1127 = vmatpush1.msra.mxu0 0.0
        %1128 = vmatprep.subr.mxu0 0.0
        %1129 = vmatpush1.msra.mxu0 0.0
        %1130 = vmatprep.subr.mxu0 0.0
        %1131 = vmatpush1.msra.mxu0 0.0
        %1132 = vmatprep.subr.mxu0 0.0
        %1133 = vmatpush1.msra.mxu0 0.0
        %1134 = vmatprep.subr.mxu0 0.0
        %1135 = vmatpush1.msra.mxu0 0.0
        %1136 = vmatprep.subr.mxu0 0.0
        %1137 = vmatpush1.msra.mxu0 0.0
        %1138 = vmatprep.subr.mxu0 0.0
        %1139 = vmatpush1.msra.mxu0 0.0
        %1140 = vmatprep.subr.mxu0 0.0
        %1141 = vmatpush1.msra.mxu0 0.0
        %1142 = vmatprep.subr.mxu0 0.0
        %1143 = vmatpush1.msra.mxu0 0.0
        %v1144 = vand.u32 %v875, 4294901760
        %1145 = vmatprep.subr.mxu0 %v1144
        %v1146 = vand.u32 %v873, 4294901760
        %1147 = vmatpush1.msra.mxu0 %v1146
        %1148 = vmatprep.subr.mxu0 0.0
        %1149 = vmatpush2.msra.mxu0 0.0
        %1150 = vmatprep.subr.mxu0 0.0
        %1151 = vmatpush2.msra.mxu0 0.0
        %1152 = vmatprep.subr.mxu0 0.0
        %1153 = vmatpush2.msra.mxu0 0.0
        %1154 = vmatprep.subr.mxu0 0.0
        %1155 = vmatpush2.msra.mxu0 0.0
        %1156 = vmatprep.subr.mxu0 0.0
        %1157 = vmatpush2.msra.mxu0 0.0
        %1158 = vmatprep.subr.mxu0 0.0
        %1159 = vmatpush2.msra.mxu0 0.0
        %1160 = vmatprep.subr.mxu0 0.0
        %1161 = vmatpush2.msra.mxu0 0.0
        %1162 = vmatprep.subr.mxu0 0.0
        %1163 = vmatpush2.msra.mxu0 0.0
        %1164 = vmatprep.subr.mxu0 0.0
        %1165 = vmatpush2.msra.mxu0 0.0
        %1166 = vmatprep.subr.mxu0 0.0
        %1167 = vmatpush2.msra.mxu0 0.0
        %1168 = vmatprep.subr.mxu0 0.0
        %1169 = vmatpush2.msra.mxu0 0.0
        %1170 = vmatprep.subr.mxu0 0.0
        %1171 = vmatpush2.msra.mxu0 0.0
        %1172 = vmatprep.subr.mxu0 0.0
        %1173 = vmatpush2.msra.mxu0 0.0
        %1174 = vmatprep.subr.mxu0 0.0
        %1175 = vmatpush2.msra.mxu0 0.0
        %1176 = vmatprep.subr.mxu0 0.0
        %1177 = vmatpush2.msra.mxu0 0.0
        %1178 = vmatprep.subr.mxu0 0.0
        %1179 = vmatpush2.msra.mxu0 0.0
        %1180 = vmatprep.mubr.f32.mxu0 0.0
        %v1181 = vand.u32 %v871, 4294901760
        %v1182 = vsub.f32 %v871, %v1181
        %v1183 = vand.u32 %v1182, 4294901760
        %1184 = vmatmul.mubr.f32.gmra.mxu0 %v1183
        %v1185 = vpop.f32.mrf.mxu0
        %v1186 = vadd.f32 %v1110, %v1185
        %v1187 = vpop.f32.mrf.mxu0
        %v1188 = vadd.f32 %v1112, %v1187
        %1189 = vdwg.mxu0
        %1190 = vmatprep.subr.mxu0 0.0
        %1191 = vmatpush1.msra.mxu0 0.0
        %1192 = vmatprep.subr.mxu0 0.0
        %1193 = vmatpush1.msra.mxu0 0.0
        %1194 = vmatprep.subr.mxu0 0.0
        %1195 = vmatpush1.msra.mxu0 0.0
        %1196 = vmatprep.subr.mxu0 0.0
        %1197 = vmatpush1.msra.mxu0 0.0
        %1198 = vmatprep.subr.mxu0 0.0
        %1199 = vmatpush1.msra.mxu0 0.0
        %1200 = vmatprep.subr.mxu0 0.0
        %1201 = vmatpush1.msra.mxu0 0.0
        %1202 = vmatprep.subr.mxu0 0.0
        %1203 = vmatpush1.msra.mxu0 0.0
        %1204 = vmatprep.subr.mxu0 0.0
        %1205 = vmatpush1.msra.mxu0 0.0
        %1206 = vmatprep.subr.mxu0 0.0
        %1207 = vmatpush1.msra.mxu0 0.0
        %1208 = vmatprep.subr.mxu0 0.0
        %1209 = vmatpush1.msra.mxu0 0.0
        %1210 = vmatprep.subr.mxu0 0.0
        %1211 = vmatpush1.msra.mxu0 0.0
        %1212 = vmatprep.subr.mxu0 0.0
        %1213 = vmatpush1.msra.mxu0 0.0
        %1214 = vmatprep.subr.mxu0 0.0
        %1215 = vmatpush1.msra.mxu0 0.0
        %1216 = vmatprep.subr.mxu0 0.0
        %1217 = vmatpush1.msra.mxu0 0.0
        %1218 = vmatprep.subr.mxu0 0.0
        %1219 = vmatpush1.msra.mxu0 0.0
        %v1220 = vand.u32 %v875, 4294901760
        %v1221 = vsub.f32 %v875, %v1220
        %v1222 = vand.u32 %v1221, 4294901760
        %1223 = vmatprep.subr.mxu0 %v1222
        %v1224 = vand.u32 %v873, 4294901760
        %v1225 = vsub.f32 %v873, %v1224
        %v1226 = vand.u32 %v1225, 4294901760
        %1227 = vmatpush1.msra.mxu0 %v1226
        %1228 = vmatprep.subr.mxu0 0.0
        %1229 = vmatpush2.msra.mxu0 0.0
        %1230 = vmatprep.subr.mxu0 0.0
        %1231 = vmatpush2.msra.mxu0 0.0
        %1232 = vmatprep.subr.mxu0 0.0
        %1233 = vmatpush2.msra.mxu0 0.0
        %1234 = vmatprep.subr.mxu0 0.0
        %1235 = vmatpush2.msra.mxu0 0.0
        %1236 = vmatprep.subr.mxu0 0.0
        %1237 = vmatpush2.msra.mxu0 0.0
        %1238 = vmatprep.subr.mxu0 0.0
        %1239 = vmatpush2.msra.mxu0 0.0
        %1240 = vmatprep.subr.mxu0 0.0
        %1241 = vmatpush2.msra.mxu0 0.0
        %1242 = vmatprep.subr.mxu0 0.0
        %1243 = vmatpush2.msra.mxu0 0.0
        %1244 = vmatprep.subr.mxu0 0.0
        %1245 = vmatpush2.msra.mxu0 0.0
        %1246 = vmatprep.subr.mxu0 0.0
        %1247 = vmatpush2.msra.mxu0 0.0
        %1248 = vmatprep.subr.mxu0 0.0
        %1249 = vmatpush2.msra.mxu0 0.0
        %1250 = vmatprep.subr.mxu0 0.0
        %1251 = vmatpush2.msra.mxu0 0.0
        %1252 = vmatprep.subr.mxu0 0.0
        %1253 = vmatpush2.msra.mxu0 0.0
        %1254 = vmatprep.subr.mxu0 0.0
        %1255 = vmatpush2.msra.mxu0 0.0
        %1256 = vmatprep.subr.mxu0 0.0
        %1257 = vmatpush2.msra.mxu0 0.0
        %1258 = vmatprep.subr.mxu0 0.0
        %1259 = vmatpush2.msra.mxu0 0.0
        %1260 = vmatprep.mubr.f32.mxu0 0.0
        %v1261 = vand.u32 %v871, 4294901760
        %1262 = vmatmul.mubr.f32.gmra.mxu0 %v1261
        %v1263 = vpop.f32.mrf.mxu0
        %v1264 = vadd.f32 %v1186, %v1263
        %v1265 = vpop.f32.mrf.mxu0
        %v1266 = vadd.f32 %v1188, %v1265
        %1267 = vdwg.mxu0
        %1268 = vmatprep.subr.mxu0 0.0
        %1269 = vmatpush1.msra.mxu0 0.0
        %1270 = vmatprep.subr.mxu0 0.0
        %1271 = vmatpush1.msra.mxu0 0.0
        %1272 = vmatprep.subr.mxu0 0.0
        %1273 = vmatpush1.msra.mxu0 0.0
        %1274 = vmatprep.subr.mxu0 0.0
        %1275 = vmatpush1.msra.mxu0 0.0
        %1276 = vmatprep.subr.mxu0 0.0
        %1277 = vmatpush1.msra.mxu0 0.0
        %1278 = vmatprep.subr.mxu0 0.0
        %1279 = vmatpush1.msra.mxu0 0.0
        %1280 = vmatprep.subr.mxu0 0.0
        %1281 = vmatpush1.msra.mxu0 0.0
        %1282 = vmatprep.subr.mxu0 0.0
        %1283 = vmatpush1.msra.mxu0 0.0
        %1284 = vmatprep.subr.mxu0 0.0
        %1285 = vmatpush1.msra.mxu0 0.0
        %1286 = vmatprep.subr.mxu0 0.0
        %1287 = vmatpush1.msra.mxu0 0.0
        %1288 = vmatprep.subr.mxu0 0.0
        %1289 = vmatpush1.msra.mxu0 0.0
        %1290 = vmatprep.subr.mxu0 0.0
        %1291 = vmatpush1.msra.mxu0 0.0
        %1292 = vmatprep.subr.mxu0 0.0
        %1293 = vmatpush1.msra.mxu0 0.0
        %1294 = vmatprep.subr.mxu0 0.0
        %1295 = vmatpush1.msra.mxu0 0.0
        %1296 = vmatprep.subr.mxu0 0.0
        %1297 = vmatpush1.msra.mxu0 0.0
        %v1298 = vand.u32 %v875, 4294901760
        %1299 = vmatprep.subr.mxu0 %v1298
        %v1300 = vand.u32 %v873, 4294901760
        %1301 = vmatpush1.msra.mxu0 %v1300
        %1302 = vmatprep.subr.mxu0 0.0
        %1303 = vmatpush2.msra.mxu0 0.0
        %1304 = vmatprep.subr.mxu0 0.0
        %1305 = vmatpush2.msra.mxu0 0.0
        %1306 = vmatprep.subr.mxu0 0.0
        %1307 = vmatpush2.msra.mxu0 0.0
        %1308 = vmatprep.subr.mxu0 0.0
        %1309 = vmatpush2.msra.mxu0 0.0
        %1310 = vmatprep.subr.mxu0 0.0
        %1311 = vmatpush2.msra.mxu0 0.0
        %1312 = vmatprep.subr.mxu0 0.0
        %1313 = vmatpush2.msra.mxu0 0.0
        %1314 = vmatprep.subr.mxu0 0.0
        %1315 = vmatpush2.msra.mxu0 0.0
        %1316 = vmatprep.subr.mxu0 0.0
        %1317 = vmatpush2.msra.mxu0 0.0
        %1318 = vmatprep.subr.mxu0 0.0
        %1319 = vmatpush2.msra.mxu0 0.0
        %1320 = vmatprep.subr.mxu0 0.0
        %1321 = vmatpush2.msra.mxu0 0.0
        %1322 = vmatprep.subr.mxu0 0.0
        %1323 = vmatpush2.msra.mxu0 0.0
        %1324 = vmatprep.subr.mxu0 0.0
        %1325 = vmatpush2.msra.mxu0 0.0
        %1326 = vmatprep.subr.mxu0 0.0
        %1327 = vmatpush2.msra.mxu0 0.0
        %1328 = vmatprep.subr.mxu0 0.0
        %1329 = vmatpush2.msra.mxu0 0.0
        %1330 = vmatprep.subr.mxu0 0.0
        %1331 = vmatpush2.msra.mxu0 0.0
        %1332 = vmatprep.subr.mxu0 0.0
        %1333 = vmatpush2.msra.mxu0 0.0
        %1334 = vmatprep.mubr.f32.mxu0 0.0
        %v1335 = vand.u32 %v871, 4294901760
        %1336 = vmatmul.mubr.f32.gmra.mxu0 %v1335
        %v1337 = vpop.f32.mrf.mxu0
        %v1338 = vadd.f32 %v1264, %v1337
        %v1339 = vpop.f32.mrf.mxu0
        %v1340 = vadd.f32 %v1266, %v1339
        %1341 = vdwg.mxu0
        %v1344 = vcombine.low %v1338, %v1340
        %1346 = vst [vmem:[%s352] sm:$0xff] %v1344
        %v1347 = vsel %vm398, %v1338, 0.0
        %v1348 = vsel %vm398, %v1340, 0.0
        %v1349 = vadd.f32 %v1347, %v1348
        %1350 = vadd.xlane.f32.xlu0 %v1349
        %v1351 = vpop.xlane.xlu0 %1350
        %vm1352 = vcmask 3072
        %1353 = vst.msk [vmem:[%s380] sm:$0xf] %vm1352, %v1351
        %v1354 = vmul.f32 %v1338, %v1338
        %v1355 = vmul.f32 %v1340, %v1340
        %v1356 = vsel %vm398, %v1354, 0.0
        %v1357 = vsel %vm398, %v1355, 0.0
        %v1358 = vadd.f32 %v1356, %v1357
        %1359 = vadd.xlane.f32.xlu0 %v1358
        %v1360 = vpop.xlane.xlu0 %1359
        %1361 = vst.msk [vmem:[%s387] sm:$0xf] %vm1352, %v1360
        %s1362 = sand.u32 %s143, 1
        %s1363 = scalar_lea.sflag [#allocation4], %s1362
        %s1364 = sand.u32 %s143, 1
        %s1365 = smul.addr %s1364, 8
        %s1366 = scalar_lea.vmem [#allocation9], %s1365
        %p1367 = scmp.lt.s32.totalorder %s27, 1
        %s1368 = scalar_select %p1367, %s27, 1
        %p1369 = scmp.lt.s32.totalorder %s28, 0
        %s1370 = scalar_select %p1369, %s28, 0
        %s1371 = sadd.s32 %s1370, %s1368
        %s1372 = smul.addr %s1371, 4
        %s1373 = scalar_lea.vmem %s5, %s1372
        %p1374 = scmp.lt.s32.totalorder %s27, 1
        %s1375 = scalar_select %p1374, %s27, 1
        %p1376 = scmp.lt.s32.totalorder %s28, 0
        %s1377 = scalar_select %p1376, %s28, 0
        %s1378 = sadd.s32 %s1377, %s1375
        %s1379 = smul.addr %s1378, 4
        %s1380 = scalar_lea.vmem %s6, %s1379
        // Predicated region
        $region53: #{tpu_custom_call.1} parent=35 // pred_check
          %p1381 = pneg %p153
        $region54: #{tpu_custom_call.1} parent=35 // pred_check_branch
          %1383 = sbr.rel (%p1381) target = $region56
        $region55: #{tpu_custom_call.1} parent=35 // pred_region
          %s1384 = smul.u32 2, %s28
          %s1386 = ssub.s32 128, 128
          %1387 = vsyncadd %s1363, %s1386
          %s1388 = smul.addr %s27, 2
          %s1389 = sadd.s32 %s1384, %s1388
          %s1390 = smul.addr %s1389, 64
          %s1391 = scalar_lea.hbm %s4, %s1390
          %s1393 = sshll.u32 %s1366, 4
          %s1394 = int_to_ptr.vmem [resolvable:$true] %s1393
          %1396 = dma.vmem_to_hbm [thread:$0]  %s1394, 128, %s1391, %s1363
        $region56: #{tpu_custom_call.1} parent=35 // pred_fallthru
          _
        // Predicated region
        $region57: #{tpu_custom_call.1} parent=35 // pred_check
          %p1397 = pneg %p181
        $region58: #{tpu_custom_call.1} parent=35 // pred_check_branch
          %1399 = sbr.rel (%p1397) target = $region60
        $region59: #{tpu_custom_call.1} parent=35 // pred_region
          _
        $region60: #{tpu_custom_call.1} parent=35 // pred_fallthru
          _
        // Predicated region
        $region61: #{tpu_custom_call.1} parent=35 // pred_check
          %p1400 = pneg %p209
        $region62: #{tpu_custom_call.1} parent=35 // pred_check_branch
          %1402 = sbr.rel (%p1400) target = $region64
        $region63: #{tpu_custom_call.1} parent=35 // pred_region
          _
        $region64: #{tpu_custom_call.1} parent=35 // pred_fallthru
          _
      $region36: #{tpu_custom_call.1} parent=5 // pred_fallthru
        _
      %p1403 = scmp.le.s32.totalorder 2, %s18
      // Predicated region
      $region65: #{tpu_custom_call.1} parent=5 // pred_check
        %p1404 = pneg %p1403
      $region66: #{tpu_custom_call.1} parent=5 // pred_check_branch
        %1406 = sbr.rel (%p1404) target = $region68
      $region67: #{tpu_custom_call.1} parent=5 // pred_region
        %s1407 = ssub.s32 %s18, 2
        // Predicated region
        $region69: #{tpu_custom_call.1} parent=67 // pred_check
          %p1408 = pneg %p159
        $region70: #{tpu_custom_call.1} parent=67 // pred_check_branch
          %1410 = sbr.rel (%p1408) target = $region72
        $region71: #{tpu_custom_call.1} parent=67 // pred_region
          %s1411 = sand.u32 %s144, 1
          %s1412 = scalar_lea.sflag [#allocation4], %s1411
          %s1413 = sand.u32 %s144, 1
          %s1414 = smul.addr %s1413, 8
          %s1415 = scalar_lea.vmem [#allocation9], %s1414
          %1416 = dma.done %s1412, 128
        $region72: #{tpu_custom_call.1} parent=67 // pred_fallthru
          _
        // Predicated region
        $region73: #{tpu_custom_call.1} parent=67 // pred_check
          %p1417 = pneg %p187
        $region74: #{tpu_custom_call.1} parent=67 // pred_check_branch
          %1419 = sbr.rel (%p1417) target = $region76
        $region75: #{tpu_custom_call.1} parent=67 // pred_region
          %p1420 = scmp.lt.s32.totalorder %s29, 1
          %s1421 = scalar_select %p1420, %s29, 1
          %p1422 = scmp.lt.s32.totalorder %s30, 0
          %s1423 = scalar_select %p1422, %s30, 0
          %s1424 = sadd.s32 %s1423, %s1421
          %s1425 = smul.addr %s1424, 4
          %s1426 = scalar_lea.vmem %s5, %s1425
        $region76: #{tpu_custom_call.1} parent=67 // pred_fallthru
          _
        // Predicated region
        $region77: #{tpu_custom_call.1} parent=67 // pred_check
          %p1427 = pneg %p215
        $region78: #{tpu_custom_call.1} parent=67 // pred_check_branch
          %1429 = sbr.rel (%p1427) target = $region80
        $region79: #{tpu_custom_call.1} parent=67 // pred_region
          %p1430 = scmp.lt.s32.totalorder %s29, 1
          %s1431 = scalar_select %p1430, %s29, 1
          %p1432 = scmp.lt.s32.totalorder %s30, 0
          %s1433 = scalar_select %p1432, %s30, 0
          %s1434 = sadd.s32 %s1433, %s1431
          %s1435 = smul.addr %s1434, 4
          %s1436 = scalar_lea.vmem %s6, %s1435
        $region80: #{tpu_custom_call.1} parent=67 // pred_fallthru
          _
      $region68: #{tpu_custom_call.1} parent=5 // pred_fallthru
        _
    $region6: #{tpu_custom_call.1} parent=1 // loop_footer
      %s22 = sadd.s32 1, %s18
    $region7: #{tpu_custom_call.1} parent=1 // loop_footer_branch
      %17 = sbr.rel target = $region3
    $region8: #{tpu_custom_call.1} parent=1 // loop_exit
      _
    %1437 = vsyncpa [#allocation3], 1
    %s1438 = scalar_lea.sflag [#allocation3], 1
    %1439 = vsyncpa %s1438, 1
    %1440 = vsyncpa [#allocation6], 1
    %1441 = vsyncpa [#allocation4], 1
    %s1442 = scalar_lea.sflag [#allocation4], 1
    %1443 = vsyncpa %s1442, 1

</llo_original>
